<compile_context>
chip_gen: v6e
topology: v6e:2x2x1
jax: 0.10.0
libtpu: 0.0.40
codegen_flags: <defaults>
</compile_context>

<pallas_src>
import functools

import jax
import jax.numpy as jnp
from jax.experimental import pallas as pl
from jax.experimental.pallas import tpu as pltpu

BN_EPS = 1e-5  # regnet_cfg.BN.EPS default


def _stem_kernel(xg_ref, w_ref, b_ref, o_ref, *, TH, Wo, Wo1, Cin):
    # xg_ref: (1, TH, 6*Wo1, Cin) bf16 -- row-gathered, column-parity-split taps.
    #         dim 2 layout: 6 groups of Wo1 columns, group index = kh*2 + parity.
    # w_ref : (9, Cin, Cout)      bf16 -- conv weight per (kh, kw), BN scale folded in.
    # b_ref : (1, Cout)           f32  -- folded BN bias.
    # o_ref : (1, Cout, TH*Wo)    f32  -- lane-dense, NCHW-ordered output tile.
    w = w_ref[...].astype(jnp.float32)                      # tiny, upcast once
    acc = None
    for kh in range(3):
        for kw in range(3):
            par, off = kw % 2, kw // 2                      # kw=0 -> even cols, 1 -> odd, 2 -> even+1
            start = (kh * 2 + par) * Wo1 + off
            tap = xg_ref[0, :, start:start + Wo, :]         # (TH, Wo, Cin), contiguous slice
            tap = tap.astype(jnp.float32).reshape(TH * Wo, Cin)
            d = jnp.dot(tap, w[kh * 3 + kw],
                        preferred_element_type=jnp.float32)  # shifted-tap matmul on MXU
            acc = d if acc is None else acc + d
    y = jnp.maximum(acc + b_ref[...], 0.0)                  # folded BN bias + ReLU
    o_ref[0] = y.T.astype(o_ref.dtype)                      # (Cout, TH*Wo): full-width stores


def simple_stem_in(x_nchw, conv_w, gamma, beta, run_mean, run_var):
    """x_nchw: (N, Cin, H, W); conv_w: (Cout, Cin, 3, 3) (PyTorch layouts)."""
    N, Cin, H, W = x_nchw.shape
    Cout = conv_w.shape[0]
    Ho = (H + 2 - 3) // 2 + 1
    Wo = (W + 2 - 3) // 2 + 1
    M, Wo1 = Ho * Wo, Wo + 1

    # Row-tile: smallest TH dividing Ho with TH*Wo a multiple of 128 (lane-dense
    # output tile, bounded VMEM); otherwise one tile per image (TILE_M == M).
    cands = [th for th in (1, 2, 4, 8, 16, 32, 64)
             if Ho % th == 0 and (th * Wo) % 128 == 0]
    TH = min(cands) if cands else Ho
    NT = Ho // TH
    TILE_M = TH * Wo

    # ---- glue: one cheap pass over the raw input (pure data movement) --------
    x = jnp.transpose(x_nchw, (0, 2, 3, 1)).astype(jnp.bfloat16)       # N,H,W,Cin
    # pad so padded dims are (2*Ho+2, 2*Wo+2): even/odd column planes both get Wo+1 cols
    x = jnp.pad(x, ((0, 0), (1, 2 * Ho + 1 - H), (1, 2 * Wo + 1 - W), (0, 0)))
    planes = (x[:, :, 0::2, :], x[:, :, 1::2, :])                      # even / odd cols
    taps = [planes[par][:, kh:kh + 2 * Ho:2, :, :]                     # (N, Ho, Wo1, Cin)
            for kh in range(3) for par in range(2)]
    xg = jnp.stack(taps, axis=2).reshape(N, Ho, 6 * Wo1, Cin)          # bf16, ~0.75x raw bytes

    # conv weight (Cout,Cin,3,3) -> (kh,kw,Cin,Cout), fold BN scale -> (9,Cin,Cout) bf16
    scale = gamma / jnp.sqrt(run_var + BN_EPS)                         # (Cout,)
    w_taps = (jnp.transpose(conv_w, (2, 3, 1, 0)) * scale).reshape(9, Cin, Cout)
    w_taps = w_taps.astype(jnp.bfloat16)
    bias = (beta - run_mean * scale).reshape(1, Cout).astype(jnp.float32)

    kernel = functools.partial(_stem_kernel, TH=TH, Wo=Wo, Wo1=Wo1, Cin=Cin)

    out = pl.pallas_call(
        kernel,
        out_shape=jax.ShapeDtypeStruct((N, Cout, M), jnp.float32),
        grid=(N, NT),
        in_specs=[
            pl.BlockSpec((1, TH, 6 * Wo1, Cin), lambda n, t: (n, t, 0, 0)),
            pl.BlockSpec((9, Cin, Cout), lambda n, t: (0, 0, 0)),
            pl.BlockSpec((1, Cout), lambda n, t: (0, 0)),
        ],
        out_specs=pl.BlockSpec((1, Cout, TILE_M), lambda n, t: (n, 0, t)),
        compiler_params=pltpu.CompilerParams(
            dimension_semantics=("parallel", "parallel"),
            vmem_limit_bytes=32 * 1024 * 1024,
        ),
    )(xg, w_taps, bias)

    # Output is already in NCHW order; this reshape is free (no transpose pass).
    return out.reshape(N, Cout, Ho, Wo)


def _reference(x, conv_w, gamma, beta, run_mean, run_var):
    y = jax.lax.conv_general_dilated(
        x.astype(jnp.float32), conv_w.astype(jnp.float32),
        window_strides=(2, 2), padding=((1, 1), (1, 1)),
        dimension_numbers=("NCHW", "OIHW", "NCHW"))
    s = gamma / jnp.sqrt(run_var + BN_EPS)
    b = beta - run_mean * s
    y = y * s[None, :, None, None] + b[None, :, None, None]
    return jnp.maximum(y, 0.0)


if __name__ == "__main__":
    key = jax.random.PRNGKey(0)
    k1, k2, k3, k4, k5, k6 = jax.random.split(key, 6)

    N, in_w, H, W = 2, 4, 16, 16
    out_w = 32

    x = jax.random.normal(k1, (N, in_w, H, W), dtype=jnp.float32)
    conv_w = jax.random.normal(k2, (out_w, in_w, 3, 3), dtype=jnp.float32) * 0.1
    gamma = jax.random.normal(k3, (out_w,), dtype=jnp.float32) * 0.1 + 1.0
    beta = jax.random.normal(k4, (out_w,), dtype=jnp.float32) * 0.1
    run_mean = jax.random.normal(k5, (out_w,), dtype=jnp.float32) * 0.1
    run_var = jax.random.uniform(k6, (out_w,), dtype=jnp.float32, minval=0.5, maxval=1.5)

    out = simple_stem_in(x, conv_w, gamma, beta, run_mean, run_var)
    out = jax.block_until_ready(out)

    ref = _reference(x, conv_w, gamma, beta, run_mean, run_var)
    assert out.shape == (N, out_w, H // 2, W // 2), out.shape
    max_err = float(jnp.max(jnp.abs(out - ref)))
    # bf16 streaming of inputs/weights -> relaxed tolerance vs f32 reference
    assert jnp.allclose(out, ref, atol=5e-2, rtol=5e-2), max_err

    print("KERNEL_OK")
</pallas_src>

<mosaic_0001>
module attributes {stable_mosaic.version = 11 : i64} {
  func.func @_stem_kernel(%arg0: i32, %arg1: i32, %arg2: memref<1x8x54x4xbf16, #tpu.memory_space<vmem>>, %arg3: memref<9x4x32xbf16, #tpu.memory_space<vmem>>, %arg4: memref<1x32xf32, #tpu.memory_space<vmem>>, %arg5: memref<1x32x64xf32, #tpu.memory_space<vmem>>) attributes {dimension_semantics = [#tpu.dimension_semantics<parallel>, #tpu.dimension_semantics<parallel>], iteration_bounds = array<i64: 2, 1>, scalar_prefetch = 0 : i64, scratch_operands = 0 : i64, tpu.core_type = #tpu.core_type<tc>, window_params = [{transform_indices = @transform_0, window_bounds = array<i64: 1, 8, 54, 4>}, {pipeline_mode = #tpu.pipeline_mode<synchronous>, transform_indices = @transform_1, window_bounds = array<i64: 9, 4, 32>}, {pipeline_mode = #tpu.pipeline_mode<synchronous>, transform_indices = @transform_2, window_bounds = array<i64: 1, 32>}, {transform_indices = @transform_3, window_bounds = array<i64: 1, 32, 64>}]} {
    %c0 = arith.constant 0 : index
    %c0_0 = arith.constant 0 : index
    %c0_1 = arith.constant 0 : index
    %0 = vector.load %arg3[%c0, %c0_0, %c0_1] : memref<9x4x32xbf16, #tpu.memory_space<vmem>>, vector<9x4x32xbf16>
    %1 = arith.extf %0 : vector<9x4x32xbf16> to vector<9x4x32xf32>
    %c0_2 = arith.constant 0 : index
    %c0_3 = arith.constant 0 : index
    %c0_4 = arith.constant 0 : index
    %c0_5 = arith.constant 0 : index
    %2 = vector.load %arg2[%c0_2, %c0_3, %c0_4, %c0_5] : memref<1x8x54x4xbf16, #tpu.memory_space<vmem>>, vector<1x8x8x4xbf16>
    %3 = vector.shape_cast %2 : vector<1x8x8x4xbf16> to vector<8x8x4xbf16>
    %4 = arith.extf %3 : vector<8x8x4xbf16> to vector<8x8x4xf32>
    %5 = vector.shape_cast %4 : vector<8x8x4xf32> to vector<64x4xf32>
    %6 = vector.extract_strided_slice %1 {offsets = [0, 0, 0], sizes = [1, 4, 32], strides = [1, 1, 1]} : vector<9x4x32xf32> to vector<1x4x32xf32>
    %7 = vector.shape_cast %6 : vector<1x4x32xf32> to vector<4x32xf32>
    %cst = arith.constant dense<0.000000e+00> : vector<64x32xf32>
    %8 = tpu.matmul %5, %7, %cst {dimension_numbers = #tpu.dot_dimension_numbers<[1], [0], [0], [1], [0, 0, 1, 1], [], []>} : vector<64x4xf32>, vector<4x32xf32>, vector<64x32xf32> -> vector<64x32xf32>
    %c0_6 = arith.constant 0 : index
    %c0_7 = arith.constant 0 : index
    %c9 = arith.constant 9 : index
    %c0_8 = arith.constant 0 : index
    %9 = vector.load %arg2[%c0_6, %c0_7, %c9, %c0_8] : memref<1x8x54x4xbf16, #tpu.memory_space<vmem>>, vector<1x8x8x4xbf16>
    %10 = vector.shape_cast %9 : vector<1x8x8x4xbf16> to vector<8x8x4xbf16>
    %11 = arith.extf %10 : vector<8x8x4xbf16> to vector<8x8x4xf32>
    %12 = vector.shape_cast %11 : vector<8x8x4xf32> to vector<64x4xf32>
    %13 = vector.extract_strided_slice %1 {offsets = [1, 0, 0], sizes = [1, 4, 32], strides = [1, 1, 1]} : vector<9x4x32xf32> to vector<1x4x32xf32>
    %14 = vector.shape_cast %13 : vector<1x4x32xf32> to vector<4x32xf32>
    %cst_9 = arith.constant dense<0.000000e+00> : vector<64x32xf32>
    %15 = tpu.matmul %12, %14, %cst_9 {dimension_numbers = #tpu.dot_dimension_numbers<[1], [0], [0], [1], [0, 0, 1, 1], [], []>} : vector<64x4xf32>, vector<4x32xf32>, vector<64x32xf32> -> vector<64x32xf32>
    %16 = arith.addf %8, %15 : vector<64x32xf32>
    %c0_10 = arith.constant 0 : index
    %c0_11 = arith.constant 0 : index
    %c1 = arith.constant 1 : index
    %c0_12 = arith.constant 0 : index
    %17 = vector.load %arg2[%c0_10, %c0_11, %c1, %c0_12] : memref<1x8x54x4xbf16, #tpu.memory_space<vmem>>, vector<1x8x8x4xbf16>
    %18 = vector.shape_cast %17 : vector<1x8x8x4xbf16> to vector<8x8x4xbf16>
    %19 = arith.extf %18 : vector<8x8x4xbf16> to vector<8x8x4xf32>
    %20 = vector.shape_cast %19 : vector<8x8x4xf32> to vector<64x4xf32>
    %21 = vector.extract_strided_slice %1 {offsets = [2, 0, 0], sizes = [1, 4, 32], strides = [1, 1, 1]} : vector<9x4x32xf32> to vector<1x4x32xf32>
    %22 = vector.shape_cast %21 : vector<1x4x32xf32> to vector<4x32xf32>
    %cst_13 = arith.constant dense<0.000000e+00> : vector<64x32xf32>
    %23 = tpu.matmul %20, %22, %cst_13 {dimension_numbers = #tpu.dot_dimension_numbers<[1], [0], [0], [1], [0, 0, 1, 1], [], []>} : vector<64x4xf32>, vector<4x32xf32>, vector<64x32xf32> -> vector<64x32xf32>
    %24 = arith.addf %16, %23 : vector<64x32xf32>
    %c0_14 = arith.constant 0 : index
    %c0_15 = arith.constant 0 : index
    %c18 = arith.constant 18 : index
    %c0_16 = arith.constant 0 : index
    %25 = vector.load %arg2[%c0_14, %c0_15, %c18, %c0_16] : memref<1x8x54x4xbf16, #tpu.memory_space<vmem>>, vector<1x8x8x4xbf16>
    %26 = vector.shape_cast %25 : vector<1x8x8x4xbf16> to vector<8x8x4xbf16>
    %27 = arith.extf %26 : vector<8x8x4xbf16> to vector<8x8x4xf32>
    %28 = vector.shape_cast %27 : vector<8x8x4xf32> to vector<64x4xf32>
    %29 = vector.extract_strided_slice %1 {offsets = [3, 0, 0], sizes = [1, 4, 32], strides = [1, 1, 1]} : vector<9x4x32xf32> to vector<1x4x32xf32>
    %30 = vector.shape_cast %29 : vector<1x4x32xf32> to vector<4x32xf32>
    %cst_17 = arith.constant dense<0.000000e+00> : vector<64x32xf32>
    %31 = tpu.matmul %28, %30, %cst_17 {dimension_numbers = #tpu.dot_dimension_numbers<[1], [0], [0], [1], [0, 0, 1, 1], [], []>} : vector<64x4xf32>, vector<4x32xf32>, vector<64x32xf32> -> vector<64x32xf32>
    %32 = arith.addf %24, %31 : vector<64x32xf32>
    %c0_18 = arith.constant 0 : index
    %c0_19 = arith.constant 0 : index
    %c27 = arith.constant 27 : index
    %c0_20 = arith.constant 0 : index
    %33 = vector.load %arg2[%c0_18, %c0_19, %c27, %c0_20] : memref<1x8x54x4xbf16, #tpu.memory_space<vmem>>, vector<1x8x8x4xbf16>
    %34 = vector.shape_cast %33 : vector<1x8x8x4xbf16> to vector<8x8x4xbf16>
    %35 = arith.extf %34 : vector<8x8x4xbf16> to vector<8x8x4xf32>
    %36 = vector.shape_cast %35 : vector<8x8x4xf32> to vector<64x4xf32>
    %37 = vector.extract_strided_slice %1 {offsets = [4, 0, 0], sizes = [1, 4, 32], strides = [1, 1, 1]} : vector<9x4x32xf32> to vector<1x4x32xf32>
    %38 = vector.shape_cast %37 : vector<1x4x32xf32> to vector<4x32xf32>
    %cst_21 = arith.constant dense<0.000000e+00> : vector<64x32xf32>
    %39 = tpu.matmul %36, %38, %cst_21 {dimension_numbers = #tpu.dot_dimension_numbers<[1], [0], [0], [1], [0, 0, 1, 1], [], []>} : vector<64x4xf32>, vector<4x32xf32>, vector<64x32xf32> -> vector<64x32xf32>
    %40 = arith.addf %32, %39 : vector<64x32xf32>
    %c0_22 = arith.constant 0 : index
    %c0_23 = arith.constant 0 : index
    %c19 = arith.constant 19 : index
    %c0_24 = arith.constant 0 : index
    %41 = vector.load %arg2[%c0_22, %c0_23, %c19, %c0_24] : memref<1x8x54x4xbf16, #tpu.memory_space<vmem>>, vector<1x8x8x4xbf16>
    %42 = vector.shape_cast %41 : vector<1x8x8x4xbf16> to vector<8x8x4xbf16>
    %43 = arith.extf %42 : vector<8x8x4xbf16> to vector<8x8x4xf32>
    %44 = vector.shape_cast %43 : vector<8x8x4xf32> to vector<64x4xf32>
    %45 = vector.extract_strided_slice %1 {offsets = [5, 0, 0], sizes = [1, 4, 32], strides = [1, 1, 1]} : vector<9x4x32xf32> to vector<1x4x32xf32>
    %46 = vector.shape_cast %45 : vector<1x4x32xf32> to vector<4x32xf32>
    %cst_25 = arith.constant dense<0.000000e+00> : vector<64x32xf32>
    %47 = tpu.matmul %44, %46, %cst_25 {dimension_numbers = #tpu.dot_dimension_numbers<[1], [0], [0], [1], [0, 0, 1, 1], [], []>} : vector<64x4xf32>, vector<4x32xf32>, vector<64x32xf32> -> vector<64x32xf32>
    %48 = arith.addf %40, %47 : vector<64x32xf32>
    %c0_26 = arith.constant 0 : index
    %c0_27 = arith.constant 0 : index
    %c36 = arith.constant 36 : index
    %c0_28 = arith.constant 0 : index
    %49 = vector.load %arg2[%c0_26, %c0_27, %c36, %c0_28] : memref<1x8x54x4xbf16, #tpu.memory_space<vmem>>, vector<1x8x8x4xbf16>
    %50 = vector.shape_cast %49 : vector<1x8x8x4xbf16> to vector<8x8x4xbf16>
    %51 = arith.extf %50 : vector<8x8x4xbf16> to vector<8x8x4xf32>
    %52 = vector.shape_cast %51 : vector<8x8x4xf32> to vector<64x4xf32>
    %53 = vector.extract_strided_slice %1 {offsets = [6, 0, 0], sizes = [1, 4, 32], strides = [1, 1, 1]} : vector<9x4x32xf32> to vector<1x4x32xf32>
    %54 = vector.shape_cast %53 : vector<1x4x32xf32> to vector<4x32xf32>
    %cst_29 = arith.constant dense<0.000000e+00> : vector<64x32xf32>
    %55 = tpu.matmul %52, %54, %cst_29 {dimension_numbers = #tpu.dot_dimension_numbers<[1], [0], [0], [1], [0, 0, 1, 1], [], []>} : vector<64x4xf32>, vector<4x32xf32>, vector<64x32xf32> -> vector<64x32xf32>
    %56 = arith.addf %48, %55 : vector<64x32xf32>
    %c0_30 = arith.constant 0 : index
    %c0_31 = arith.constant 0 : index
    %c45 = arith.constant 45 : index
    %c0_32 = arith.constant 0 : index
    %57 = vector.load %arg2[%c0_30, %c0_31, %c45, %c0_32] : memref<1x8x54x4xbf16, #tpu.memory_space<vmem>>, vector<1x8x8x4xbf16>
    %58 = vector.shape_cast %57 : vector<1x8x8x4xbf16> to vector<8x8x4xbf16>
    %59 = arith.extf %58 : vector<8x8x4xbf16> to vector<8x8x4xf32>
    %60 = vector.shape_cast %59 : vector<8x8x4xf32> to vector<64x4xf32>
    %61 = vector.extract_strided_slice %1 {offsets = [7, 0, 0], sizes = [1, 4, 32], strides = [1, 1, 1]} : vector<9x4x32xf32> to vector<1x4x32xf32>
    %62 = vector.shape_cast %61 : vector<1x4x32xf32> to vector<4x32xf32>
    %cst_33 = arith.constant dense<0.000000e+00> : vector<64x32xf32>
    %63 = tpu.matmul %60, %62, %cst_33 {dimension_numbers = #tpu.dot_dimension_numbers<[1], [0], [0], [1], [0, 0, 1, 1], [], []>} : vector<64x4xf32>, vector<4x32xf32>, vector<64x32xf32> -> vector<64x32xf32>
    %64 = arith.addf %56, %63 : vector<64x32xf32>
    %c0_34 = arith.constant 0 : index
    %c0_35 = arith.constant 0 : index
    %c37 = arith.constant 37 : index
    %c0_36 = arith.constant 0 : index
    %65 = vector.load %arg2[%c0_34, %c0_35, %c37, %c0_36] : memref<1x8x54x4xbf16, #tpu.memory_space<vmem>>, vector<1x8x8x4xbf16>
    %66 = vector.shape_cast %65 : vector<1x8x8x4xbf16> to vector<8x8x4xbf16>
    %67 = arith.extf %66 : vector<8x8x4xbf16> to vector<8x8x4xf32>
    %68 = vector.shape_cast %67 : vector<8x8x4xf32> to vector<64x4xf32>
    %69 = vector.extract_strided_slice %1 {offsets = [8, 0, 0], sizes = [1, 4, 32], strides = [1, 1, 1]} : vector<9x4x32xf32> to vector<1x4x32xf32>
    %70 = vector.shape_cast %69 : vector<1x4x32xf32> to vector<4x32xf32>
    %cst_37 = arith.constant dense<0.000000e+00> : vector<64x32xf32>
    %71 = tpu.matmul %68, %70, %cst_37 {dimension_numbers = #tpu.dot_dimension_numbers<[1], [0], [0], [1], [0, 0, 1, 1], [], []>} : vector<64x4xf32>, vector<4x32xf32>, vector<64x32xf32> -> vector<64x32xf32>
    %72 = arith.addf %64, %71 : vector<64x32xf32>
    %c0_38 = arith.constant 0 : index
    %c0_39 = arith.constant 0 : index
    %73 = vector.load %arg4[%c0_38, %c0_39] : memref<1x32xf32, #tpu.memory_space<vmem>>, vector<1x32xf32>
    %74 = vector.broadcast %73 : vector<1x32xf32> to vector<64x32xf32>
    %75 = arith.addf %72, %74 : vector<64x32xf32>
    %cst_40 = arith.constant 0.000000e+00 : f32
    %76 = vector.broadcast %cst_40 : f32 to vector<64x32xf32>
    %77 = arith.maximumf %75, %76 : vector<64x32xf32>
    %78 = tpu.transpose %77, [1, 0] : vector<64x32xf32> -> vector<32x64xf32>
    %c0_41 = arith.constant 0 : index
    %c0_42 = arith.constant 0 : index
    %c0_43 = arith.constant 0 : index
    %79 = vector.load %arg5[%c0_41, %c0_42, %c0_43] : memref<1x32x64xf32, #tpu.memory_space<vmem>>, vector<1x32x64xf32>
    %80 = vector.shape_cast %79 : vector<1x32x64xf32> to vector<32x64xf32>
    %81 = vector.shape_cast %78 : vector<32x64xf32> to vector<1x32x64xf32>
    tpu.vector_store %arg5[%c0_41, %c0_42, %c0_43], %81 {strides = array<i32>} : memref<1x32x64xf32, #tpu.memory_space<vmem>>, vector<1x32x64xf32>,
    return
  }
  func.func @transform_0(%arg0: i32, %arg1: i32) -> (i32, i32, i32, i32) {
    %c0_i32 = arith.constant 0 : i32
    %c0_i32_0 = arith.constant 0 : i32
    %c0_i32_1 = arith.constant 0 : i32
    return %arg0, %arg1, %c0_i32, %c0_i32_0 : i32, i32, i32, i32
  }
  func.func @transform_1(%arg0: i32, %arg1: i32) -> (i32, i32, i32) {
    %c0_i32 = arith.constant 0 : i32
    %c0_i32_0 = arith.constant 0 : i32
    %c0_i32_1 = arith.constant 0 : i32
    %c0_i32_2 = arith.constant 0 : i32
    return %c0_i32, %c0_i32_0, %c0_i32_1 : i32, i32, i32
  }
  func.func @transform_2(%arg0: i32, %arg1: i32) -> (i32, i32) {
    %c0_i32 = arith.constant 0 : i32
    %c0_i32_0 = arith.constant 0 : i32
    %c0_i32_1 = arith.constant 0 : i32
    return %c0_i32, %c0_i32_0 : i32, i32
  }
  func.func @transform_3(%arg0: i32, %arg1: i32) -> (i32, i32, i32) {
    %c0_i32 = arith.constant 0 : i32
    %c0_i32_0 = arith.constant 0 : i32
    return %arg0, %c0_i32, %arg1 : i32, i32, i32
  }
}

</mosaic_0001>

<llo_original>
// kernel: tpu_custom_call.1
$region0: #{tpu_custom_call.1}
  #allocation0 [shape = 'u32[]', space=smem, size = 0x4, offset = 0x4, fixed_abs, tag = 'smem constant byte address 0x4 - core index']
  #allocation1 [shape = 'u32[144,128]{1,0:T(1,128)}', space=vmem, size = 0x12000, scoped, tag = 'internal scratch']
  %s0 = inlined_call_operand.vmem [shape: bf16[2,8,54,4], index: 0, kind: input, shape index: {}]
  %s1 = inlined_call_operand.vmem [shape: bf16[9,4,32], index: 1, kind: input, shape index: {}]
  %s2 = inlined_call_operand.vmem [shape: f32[1,32], index: 2, kind: input, shape index: {}]
  %s3 = inlined_call_operand.hbm [shape: f32[2,32,64], index: 3, kind: output, shape index: {}]
  %s4 = sld [smem:[#allocation0]]
  $region45: #{tpu_custom_call.1} parent=0
    _
  %s6 = ssub.s32 1, %s4
  %s7 = scalar_select 0, %s6, %s4
  $region1: #{tpu_custom_call.1} parent=0
    #allocation2 [shape = 'u8[32768]{0}', space=vmem, size = 0x8000, scoped, tag = 'output window, operand 0']
    #allocation3 [shape = 's32[2]{0}', space=sflag, size = 0x8, scoped, tag = 'scoped memory for tpu_custom_call.1']
    %8 = vsyncpa [#allocation3], 0
    %s9 = scalar_lea.sflag [#allocation3], 1
    %10 = vsyncpa %s9, 0
    loop: start=0, step=1, limit=4
    $region2: #{tpu_custom_call.1} parent=1 // loop_pre_header
      _
    $region3: #{tpu_custom_call.1} parent=1 // loop_header
      %s12 = sphi 0, %s16
      %p13 = scmp.ge.s32.totalorder %s12, 4
      %s19 = sphi 0, %s31
      %s20 = sphi 0, %s27
      %s21 = sphi 0, %s19
      %s22 = sphi 0, %s20
      %s23 = sphi 0, %s21
      %s24 = sphi 0, %s22
      %s36 = sphi 0, %s38
      %s39 = sphi 0, %s36
      %s40 = sphi 0, %s39
      %s56 = sphi 0, %s40
      %s60 = sphi 0, %s60
      %s62 = sphi 0, %s60
      %s63 = sphi 0, %s62
      %s77 = sphi 0, %s63
      %s81 = sphi 0, %s81
      %s83 = sphi 0, %s81
      %s84 = sphi 0, %s83
      %s98 = sphi 0, %s84
      %s106 = sphi 0, %s108
      %s109 = sphi 0, %s106
      %s110 = sphi 0, %s109
      %s126 = sphi 0, %s110
    $region4: #{tpu_custom_call.1} parent=1 // loop_header_branch
      %15 = sbr.rel (%p13) target = $region8
    $region5: #{tpu_custom_call.1} parent=1 // loop_body
      %s17 = ssub.s32 %s12, 1
      %s18 = ssub.s32 %s12, 2
      %s25 = sadd.s32 1, %s20
      %p26 = scmp.ge.s32.totalorder %s25, 1
      %s27 = scalar_select %p26, 0, %s25
      %s28 = sadd.s32 1, %s19
      %s29 = scalar_select %p26, %s28, %s19
      %p30 = scmp.ge.s32.totalorder %s29, 2
      %s31 = scalar_select %p30, 0, %s29
      %s32 = ssub.s32 %s19, %s31
      %s33 = ssub.s32 %s20, %s27
      %s34 = sor.u32 %s32, %s33
      %p35 = scmp.eq.s32.totalorder %s34, 0
      %s37 = sadd.s32 %s36, 1
      %s38 = scalar_select %p35, %s36, %s37
      %p41 = pneg %p35
      %p42 = scmp.eq.s32.totalorder %s12, 1
      %p43 = por %p41, %p42
      %p44 = scmp.ne.s32.totalorder %s36, %s39
      %p45 = scmp.eq.s32.totalorder %s12, 0
      %p46 = por %p44, %p45
      %p47 = scmp.ne.s32.totalorder %s36, %s39
      %p48 = scmp.eq.s32.totalorder %s17, 1
      %p49 = por %p47, %p48
      %p50 = scmp.ne.s32.totalorder %s39, %s40
      %p51 = scmp.eq.s32.totalorder %s17, 0
      %p52 = por %p50, %p51
      %p53 = scmp.ne.s32.totalorder %s39, %s40
      %p54 = scmp.eq.s32.totalorder %s18, 1
      %p55 = por %p53, %p54
      %p57 = scmp.ne.s32.totalorder %s40, %s56
      %p58 = scmp.eq.s32.totalorder %s18, 0
      %p59 = por %p57, %p58
      %s61 = sadd.s32 %s60, 1
      %p64 = scmp.eq.s32.totalorder %s12, 1
      %p65 = scmp.ne.s32.totalorder %s60, %s62
      %p66 = scmp.eq.s32.totalorder %s12, 0
      %p67 = por %p65, %p66
      %p68 = scmp.ne.s32.totalorder %s60, %s62
      %p69 = scmp.eq.s32.totalorder %s17, 1
      %p70 = por %p68, %p69
      %p71 = scmp.ne.s32.totalorder %s62, %s63
      %p72 = scmp.eq.s32.totalorder %s17, 0
      %p73 = por %p71, %p72
      %p74 = scmp.ne.s32.totalorder %s62, %s63
      %p75 = scmp.eq.s32.totalorder %s18, 1
      %p76 = por %p74, %p75
      %p78 = scmp.ne.s32.totalorder %s63, %s77
      %p79 = scmp.eq.s32.totalorder %s18, 0
      %p80 = por %p78, %p79
      %s82 = sadd.s32 %s81, 1
      %p85 = scmp.eq.s32.totalorder %s12, 1
      %p86 = scmp.ne.s32.totalorder %s81, %s83
      %p87 = scmp.eq.s32.totalorder %s12, 0
      %p88 = por %p86, %p87
      %p89 = scmp.ne.s32.totalorder %s81, %s83
      %p90 = scmp.eq.s32.totalorder %s17, 1
      %p91 = por %p89, %p90
      %p92 = scmp.ne.s32.totalorder %s83, %s84
      %p93 = scmp.eq.s32.totalorder %s17, 0
      %p94 = por %p92, %p93
      %p95 = scmp.ne.s32.totalorder %s83, %s84
      %p96 = scmp.eq.s32.totalorder %s18, 1
      %p97 = por %p95, %p96
      %p99 = scmp.ne.s32.totalorder %s84, %s98
      %p100 = scmp.eq.s32.totalorder %s18, 0
      %p101 = por %p99, %p100
      %s102 = ssub.s32 %s19, %s31
      %s103 = ssub.s32 %s20, %s27
      %s104 = sor.u32 %s102, %s103
      %p105 = scmp.eq.s32.totalorder %s104, 0
      %s107 = sadd.s32 %s106, 1
      %s108 = scalar_select %p105, %s106, %s107
      %p111 = pneg %p105
      %p112 = scmp.eq.s32.totalorder %s12, 1
      %p113 = por %p111, %p112
      %p114 = scmp.ne.s32.totalorder %s106, %s109
      %p115 = scmp.eq.s32.totalorder %s12, 0
      %p116 = por %p114, %p115
      %p117 = scmp.ne.s32.totalorder %s106, %s109
      %p118 = scmp.eq.s32.totalorder %s17, 1
      %p119 = por %p117, %p118
      %p120 = scmp.ne.s32.totalorder %s109, %s110
      %p121 = scmp.eq.s32.totalorder %s17, 0
      %p122 = por %p120, %p121
      %p123 = scmp.ne.s32.totalorder %s109, %s110
      %p124 = scmp.eq.s32.totalorder %s18, 1
      %p125 = por %p123, %p124
      %p127 = scmp.ne.s32.totalorder %s110, %s126
      %p128 = scmp.eq.s32.totalorder %s18, 0
      %p129 = por %p127, %p128
      %p130 = scmp.le.s32.totalorder 1, %s12
      %p131 = scmp.lt.s32.totalorder %s12, 3
      %p132 = pnand %p130, %p131
      %p133 = pneg %p132
      // Predicated region
      $region9: #{tpu_custom_call.1} parent=5 // pred_check
        _
      $region10: #{tpu_custom_call.1} parent=5 // pred_check_branch
        %135 = sbr.rel (%p132) target = $region12
      $region11: #{tpu_custom_call.1} parent=5 // pred_region
        %s136 = ssub.s32 %s12, 1
        // Predicated region
        $region13: #{tpu_custom_call.1} parent=11 // pred_check
          %p137 = pneg %p73
        $region14: #{tpu_custom_call.1} parent=11 // pred_check_branch
          %139 = sbr.rel (%p137) target = $region16
        $region15: #{tpu_custom_call.1} parent=11 // pred_region
          _
        $region16: #{tpu_custom_call.1} parent=11 // pred_fallthru
          _
        // Predicated region
        $region17: #{tpu_custom_call.1} parent=11 // pred_check
          %p140 = pneg %p94
        $region18: #{tpu_custom_call.1} parent=11 // pred_check_branch
          %142 = sbr.rel (%p140) target = $region20
        $region19: #{tpu_custom_call.1} parent=11 // pred_region
          _
        $region20: #{tpu_custom_call.1} parent=11 // pred_fallthru
          _
      $region12: #{tpu_custom_call.1} parent=5 // pred_fallthru
        _
      %p143 = scmp.lt.s32.totalorder %s12, 2
      // Predicated region
      $region21: #{tpu_custom_call.1} parent=5 // pred_check
        %p144 = pneg %p143
      $region22: #{tpu_custom_call.1} parent=5 // pred_check_branch
        %146 = sbr.rel (%p144) target = $region24
      $region23: #{tpu_custom_call.1} parent=5 // pred_region
        // Predicated region
        $region25: #{tpu_custom_call.1} parent=23 // pred_check
          %p147 = pneg %p46
        $region26: #{tpu_custom_call.1} parent=23 // pred_check_branch
          %149 = sbr.rel (%p147) target = $region28
        $region27: #{tpu_custom_call.1} parent=23 // pred_region
          %s150 = smul.u32 8, %s20
          %p151 = scmp.lt.s32.totalorder %s19, 1
          %s152 = scalar_select %p151, %s19, 1
          %p153 = scmp.lt.s32.totalorder %s150, 7
          %s154 = scalar_select %p153, %s150, 7
          %s155 = smul.addr %s154, 7
          %s156 = smul.addr %s152, 56
          %s157 = sadd.s32 %s155, %s156
          %s158 = smul.addr %s157, 4
          %s159 = scalar_lea.vmem %s0, %s158
          %s160 = smul.u32 8, %s20
        $region28: #{tpu_custom_call.1} parent=23 // pred_fallthru
          _
      $region24: #{tpu_custom_call.1} parent=5 // pred_fallthru
        _
      %p161 = scmp.le.s32.totalorder 1, %s12
      %p162 = scmp.lt.s32.totalorder %s12, 3
      %p163 = pnand %p161, %p162
      %p164 = pneg %p163
      // Predicated region
      $region29: #{tpu_custom_call.1} parent=5 // pred_check
        _
      $region30: #{tpu_custom_call.1} parent=5 // pred_check_branch
        %166 = sbr.rel (%p163) target = $region32
      $region31: #{tpu_custom_call.1} parent=5 // pred_region
        %s167 = ssub.s32 %s12, 1
        %s168 = smul.u32 8, %s22
        %p169 = scmp.lt.s32.totalorder %s21, 1
        %s170 = scalar_select %p169, %s21, 1
        %p171 = scmp.lt.s32.totalorder %s168, 7
        %s172 = scalar_select %p171, %s168, 7
        %s173 = smul.addr %s172, 7
        %s174 = smul.addr %s170, 56
        %s175 = sadd.s32 %s173, %s174
        %s176 = smul.addr %s175, 4
        %s177 = scalar_lea.vmem %s0, %s176
        %p178 = pneg %p52
        %p179 = pneg %p49
        %p180 = pneg %p73
        %p181 = pneg %p70
        %p182 = pneg %p94
        %p183 = pneg %p91
        %p184 = pneg %p122
        %p185 = pneg %p119
        %s186 = sand.u32 %s109, 1
        %s187 = scalar_lea.sflag [#allocation3], %s186
        %s188 = sand.u32 %s109, 1
        %s189 = smul.addr %s188, 32
        %s190 = scalar_lea.vmem [#allocation2], %s189
        %s191 = smul.u32 8, %s22
        %p192 = scmp.lt.s32.totalorder %s21, 1
        %s193 = scalar_select %p192, %s21, 1
        %p194 = scmp.lt.s32.totalorder %s191, 7
        %s195 = scalar_select %p194, %s191, 7
        %s196 = smul.addr %s195, 7
        %s197 = smul.addr %s193, 56
        %s198 = sadd.s32 %s196, %s197
        %s199 = smul.addr %s198, 4
        %s200 = scalar_lea.vmem %s0, %s199
        %s201 = smul.u32 8, %s22
        %v202 = vld [vmem:[%s1] sm:$0x3]
        %v203 = vld [vmem:[%s1 + $0x2] sm:$0x3]
        %v204 = vld [vmem:[%s1 + $0x4] sm:$0x3]
        %v205 = vld [vmem:[%s1 + $0x6] sm:$0x3]
        %v206 = vld [vmem:[%s1 + $0x8] sm:$0x3]
        %v207 = vld [vmem:[%s1 + $0xa] sm:$0x3]
        %v208 = vld [vmem:[%s1 + $0xc] sm:$0x3]
        %v209 = vld [vmem:[%s1 + $0xe] sm:$0x3]
        %v210 = vld [vmem:[%s1 + $0x10] sm:$0x3]
        %v211 = vunpack.c.l.bf16 %v202
        %v212 = vunpack.c.l.bf16 %v203
        %v213 = vunpack.c.l.bf16 %v204
        %v214 = vunpack.c.l.bf16 %v205
        %v215 = vunpack.c.l.bf16 %v206
        %v216 = vunpack.c.l.bf16 %v207
        %v217 = vunpack.c.l.bf16 %v208
        %v218 = vunpack.c.l.bf16 %v209
        %v219 = vunpack.c.l.bf16 %v210
        %v220 = vld [vmem:[%s200] sm:$0xf]
        %v221 = vld [vmem:[%s200 + $0x1c] sm:$0xf]
        %v222 = vld [vmem:[%s200 + $0x38] sm:$0xf]
        %v223 = vld [vmem:[%s200 + $0x54] sm:$0xf]
        %v224 = vld [vmem:[%s200 + $0x70] sm:$0xf]
        %v225 = vld [vmem:[%s200 + $0x8c] sm:$0xf]
        %v226 = vld [vmem:[%s200 + $0xa8] sm:$0xf]
        %v227 = vld [vmem:[%s200 + $0xc4] sm:$0xf]
        %v228 = vunpack.c.l.bf16 %v220
        %v229 = vunpack.c.l.bf16 %v221
        %v230 = vunpack.c.l.bf16 %v222
        %v231 = vunpack.c.l.bf16 %v223
        %v232 = vunpack.c.l.bf16 %v224
        %v233 = vunpack.c.l.bf16 %v225
        %v234 = vunpack.c.l.bf16 %v226
        %v235 = vunpack.c.l.bf16 %v227
        %v236 = vld [vmem:[%s200 + $0x4] sm:$0xf]
        %v237 = vld [vmem:[%s200 + $0x8] sm:$0x1]
        %v238 = vld [vmem:[%s200 + $0x20] sm:$0xf]
        %v239 = vld [vmem:[%s200 + $0x24] sm:$0x1]
        %v240 = vld [vmem:[%s200 + $0x3c] sm:$0xf]
        %v241 = vld [vmem:[%s200 + $0x40] sm:$0x1]
        %v242 = vld [vmem:[%s200 + $0x58] sm:$0xf]
        %v243 = vld [vmem:[%s200 + $0x5c] sm:$0x1]
        %v244 = vld [vmem:[%s200 + $0x74] sm:$0xf]
        %v245 = vld [vmem:[%s200 + $0x78] sm:$0x1]
        %v246 = vld [vmem:[%s200 + $0x90] sm:$0xf]
        %v247 = vld [vmem:[%s200 + $0x94] sm:$0x1]
        %v248 = vld [vmem:[%s200 + $0xac] sm:$0xf]
        %v249 = vld [vmem:[%s200 + $0xb0] sm:$0x1]
        %v250 = vld [vmem:[%s200 + $0xc8] sm:$0xf]
        %v251 = vld [vmem:[%s200 + $0xcc] sm:$0x1]
        %v252 = vunpack.c.l.bf16 %v236
        %v253 = vunpack.c.l.bf16 %v237
        %v254 = vunpack.c.l.bf16 %v238
        %v255 = vunpack.c.l.bf16 %v239
        %v256 = vunpack.c.l.bf16 %v240
        %v257 = vunpack.c.l.bf16 %v241
        %v258 = vunpack.c.l.bf16 %v242
        %v259 = vunpack.c.l.bf16 %v243
        %v260 = vunpack.c.l.bf16 %v244
        %v261 = vunpack.c.l.bf16 %v245
        %v262 = vunpack.c.l.bf16 %v246
        %v263 = vunpack.c.l.bf16 %v247
        %v264 = vunpack.c.l.bf16 %v248
        %v265 = vunpack.c.l.bf16 %v249
        %v266 = vunpack.c.l.bf16 %v250
        %v267 = vunpack.c.l.bf16 %v251
        %vm284 = vcmask 1046528
        %v285 = vrot.slane %v252, 1
        %v286 = vrot.slane %v253, 1
        %v287 = vsel %vm284, %v285, %v286
        %v288 = vrot.slane %v254, 1
        %v289 = vrot.slane %v255, 1
        %v290 = vsel %vm284, %v288, %v289
        %v291 = vrot.slane %v256, 1
        %v292 = vrot.slane %v257, 1
        %v293 = vsel %vm284, %v291, %v292
        %v294 = vrot.slane %v258, 1
        %v295 = vrot.slane %v259, 1
        %v296 = vsel %vm284, %v294, %v295
        %v297 = vrot.slane %v260, 1
        %v298 = vrot.slane %v261, 1
        %v299 = vsel %vm284, %v297, %v298
        %v300 = vrot.slane %v262, 1
        %v301 = vrot.slane %v263, 1
        %v302 = vsel %vm284, %v300, %v301
        %v303 = vrot.slane %v264, 1
        %v304 = vrot.slane %v265, 1
        %v305 = vsel %vm284, %v303, %v304
        %v306 = vrot.slane %v266, 1
        %v307 = vrot.slane %v267, 1
        %v308 = vsel %vm284, %v306, %v307
        %vm309 = vcmask 31744
        %v310 = vsel %vm309, %v287, 0
        %v312 = vsel %vm309, %v290, 0
        %v314 = vsel %vm309, %v293, 0
        %v316 = vsel %vm309, %v296, 0
        %v318 = vsel %vm309, %v299, 0
        %v320 = vsel %vm309, %v302, 0
        %v322 = vsel %vm309, %v305, 0
        %v324 = vsel %vm309, %v308, 0
        %vm326 = vcmask 1043456
        %v328 = vsel %vm326, %v212, 0
        %330 = vmatprep.subr.mxu0 0.0
        %331 = vmatpush1.msra.mxu0 0.0
        %332 = vmatprep.subr.mxu0 0.0
        %333 = vmatpush1.msra.mxu0 0.0
        %334 = vmatprep.subr.mxu0 0.0
        %335 = vmatpush1.msra.mxu0 0.0
        %336 = vmatprep.subr.mxu0 0.0
        %337 = vmatpush1.msra.mxu0 0.0
        %338 = vmatprep.subr.mxu0 0.0
        %339 = vmatpush1.msra.mxu0 0.0
        %340 = vmatprep.subr.mxu0 0.0
        %341 = vmatpush1.msra.mxu0 0.0
        %342 = vmatprep.subr.mxu0 0.0
        %343 = vmatpush1.msra.mxu0 0.0
        %344 = vmatprep.subr.mxu0 0.0
        %345 = vmatpush1.msra.mxu0 0.0
        %346 = vmatprep.subr.mxu0 0.0
        %347 = vmatpush1.msra.mxu0 0.0
        %348 = vmatprep.subr.mxu0 0.0
        %349 = vmatpush1.msra.mxu0 0.0
        %350 = vmatprep.subr.mxu0 0.0
        %351 = vmatpush1.msra.mxu0 0.0
        %352 = vmatprep.subr.mxu0 0.0
        %353 = vmatpush1.msra.mxu0 0.0
        %354 = vmatprep.subr.mxu0 0.0
        %355 = vmatpush1.msra.mxu0 0.0
        %356 = vmatprep.subr.mxu0 0.0
        %357 = vmatpush1.msra.mxu0 0.0
        %358 = vmatprep.subr.mxu0 0.0
        %359 = vmatpush1.msra.mxu0 0.0
        %360 = vmatprep.subr.mxu0 0.0
        %361 = vmatpush1.msra.mxu0 %v328
        %362 = vmatprep.subr.mxu0 0.0
        %363 = vmatpush2.msra.mxu0 0.0
        %364 = vmatprep.subr.mxu0 0.0
        %365 = vmatpush2.msra.mxu0 0.0
        %366 = vmatprep.subr.mxu0 0.0
        %367 = vmatpush2.msra.mxu0 0.0
        %368 = vmatprep.subr.mxu0 0.0
        %369 = vmatpush2.msra.mxu0 0.0
        %370 = vmatprep.subr.mxu0 0.0
        %371 = vmatpush2.msra.mxu0 0.0
        %372 = vmatprep.subr.mxu0 0.0
        %373 = vmatpush2.msra.mxu0 0.0
        %374 = vmatprep.subr.mxu0 0.0
        %375 = vmatpush2.msra.mxu0 0.0
        %376 = vmatprep.subr.mxu0 0.0
        %377 = vmatpush2.msra.mxu0 0.0
        %378 = vmatprep.subr.mxu0 0.0
        %379 = vmatpush2.msra.mxu0 0.0
        %380 = vmatprep.subr.mxu0 0.0
        %381 = vmatpush2.msra.mxu0 0.0
        %382 = vmatprep.subr.mxu0 0.0
        %383 = vmatpush2.msra.mxu0 0.0
        %384 = vmatprep.subr.mxu0 0.0
        %385 = vmatpush2.msra.mxu0 0.0
        %386 = vmatprep.subr.mxu0 0.0
        %387 = vmatpush2.msra.mxu0 0.0
        %388 = vmatprep.subr.mxu0 0.0
        %389 = vmatpush2.msra.mxu0 0.0
        %390 = vmatprep.subr.mxu0 0.0
        %391 = vmatpush2.msra.mxu0 0.0
        %392 = vmatprep.subr.mxu0 0.0
        %393 = vmatpush2.msra.mxu0 0.0
        %394 = vmatprep.mubr.f32.mxu0 0.0
        %395 = vmatmul.mubr.f32.gmra.mxu0 %v310
        %v396 = vpop.f32.mrf.mxu0
        %v397 = vadd.f32 0.0, %v396
        %v398 = vpop.f32.mrf.mxu0
        %399 = vmatprep.mubr.f32.mxu0 0.0
        %400 = vmatmul.mubr.f32.gmra.mxu0 %v312
        %v401 = vpop.f32.mrf.mxu0
        %v402 = vadd.f32 0.0, %v401
        %v403 = vpop.f32.mrf.mxu0
        %404 = vmatprep.mubr.f32.mxu0 0.0
        %405 = vmatmul.mubr.f32.gmra.mxu0 %v314
        %v406 = vpop.f32.mrf.mxu0
        %v407 = vadd.f32 0.0, %v406
        %v408 = vpop.f32.mrf.mxu0
        %409 = vmatprep.mubr.f32.mxu0 0.0
        %410 = vmatmul.mubr.f32.gmra.mxu0 %v316
        %v411 = vpop.f32.mrf.mxu0
        %v412 = vadd.f32 0.0, %v411
        %v413 = vpop.f32.mrf.mxu0
        %414 = vmatprep.mubr.f32.mxu0 0.0
        %415 = vmatmul.mubr.f32.gmra.mxu0 %v318
        %v416 = vpop.f32.mrf.mxu0
        %v417 = vadd.f32 0.0, %v416
        %v418 = vpop.f32.mrf.mxu0
        %419 = vmatprep.mubr.f32.mxu0 0.0
        %420 = vmatmul.mubr.f32.gmra.mxu0 %v320
        %v421 = vpop.f32.mrf.mxu0
        %v422 = vadd.f32 0.0, %v421
        %v423 = vpop.f32.mrf.mxu0
        %424 = vmatprep.mubr.f32.mxu0 0.0
        %425 = vmatmul.mubr.f32.gmra.mxu0 %v322
        %v426 = vpop.f32.mrf.mxu0
        %v427 = vadd.f32 0.0, %v426
        %v428 = vpop.f32.mrf.mxu0
        %429 = vmatprep.mubr.f32.mxu0 0.0
        %430 = vmatmul.mubr.f32.gmra.mxu0 %v324
        %v431 = vpop.f32.mrf.mxu0
        %v432 = vadd.f32 0.0, %v431
        %v433 = vpop.f32.mrf.mxu0
        %434 = vdwg.mxu0
        %v436 = vsel %vm309, %v228, 0
        %v439 = vsel %vm309, %v229, 0
        %v442 = vsel %vm309, %v230, 0
        %v445 = vsel %vm309, %v231, 0
        %v448 = vsel %vm309, %v232, 0
        %v451 = vsel %vm309, %v233, 0
        %v454 = vsel %vm309, %v234, 0
        %v457 = vsel %vm309, %v235, 0
        %v460 = vsel %vm326, %v211, 0
        %462 = vmatprep.subr.mxu0 0.0
        %463 = vmatpush1.msra.mxu0 0.0
        %464 = vmatprep.subr.mxu0 0.0
        %465 = vmatpush1.msra.mxu0 0.0
        %466 = vmatprep.subr.mxu0 0.0
        %467 = vmatpush1.msra.mxu0 0.0
        %468 = vmatprep.subr.mxu0 0.0
        %469 = vmatpush1.msra.mxu0 0.0
        %470 = vmatprep.subr.mxu0 0.0
        %471 = vmatpush1.msra.mxu0 0.0
        %472 = vmatprep.subr.mxu0 0.0
        %473 = vmatpush1.msra.mxu0 0.0
        %474 = vmatprep.subr.mxu0 0.0
        %475 = vmatpush1.msra.mxu0 0.0
        %476 = vmatprep.subr.mxu0 0.0
        %477 = vmatpush1.msra.mxu0 0.0
        %478 = vmatprep.subr.mxu0 0.0
        %479 = vmatpush1.msra.mxu0 0.0
        %480 = vmatprep.subr.mxu0 0.0
        %481 = vmatpush1.msra.mxu0 0.0
        %482 = vmatprep.subr.mxu0 0.0
        %483 = vmatpush1.msra.mxu0 0.0
        %484 = vmatprep.subr.mxu0 0.0
        %485 = vmatpush1.msra.mxu0 0.0
        %486 = vmatprep.subr.mxu0 0.0
        %487 = vmatpush1.msra.mxu0 0.0
        %488 = vmatprep.subr.mxu0 0.0
        %489 = vmatpush1.msra.mxu0 0.0
        %490 = vmatprep.subr.mxu0 0.0
        %491 = vmatpush1.msra.mxu0 0.0
        %492 = vmatprep.subr.mxu0 0.0
        %493 = vmatpush1.msra.mxu0 %v460
        %494 = vmatprep.subr.mxu0 0.0
        %495 = vmatpush2.msra.mxu0 0.0
        %496 = vmatprep.subr.mxu0 0.0
        %497 = vmatpush2.msra.mxu0 0.0
        %498 = vmatprep.subr.mxu0 0.0
        %499 = vmatpush2.msra.mxu0 0.0
        %500 = vmatprep.subr.mxu0 0.0
        %501 = vmatpush2.msra.mxu0 0.0
        %502 = vmatprep.subr.mxu0 0.0
        %503 = vmatpush2.msra.mxu0 0.0
        %504 = vmatprep.subr.mxu0 0.0
        %505 = vmatpush2.msra.mxu0 0.0
        %506 = vmatprep.subr.mxu0 0.0
        %507 = vmatpush2.msra.mxu0 0.0
        %508 = vmatprep.subr.mxu0 0.0
        %509 = vmatpush2.msra.mxu0 0.0
        %510 = vmatprep.subr.mxu0 0.0
        %511 = vmatpush2.msra.mxu0 0.0
        %512 = vmatprep.subr.mxu0 0.0
        %513 = vmatpush2.msra.mxu0 0.0
        %514 = vmatprep.subr.mxu0 0.0
        %515 = vmatpush2.msra.mxu0 0.0
        %516 = vmatprep.subr.mxu0 0.0
        %517 = vmatpush2.msra.mxu0 0.0
        %518 = vmatprep.subr.mxu0 0.0
        %519 = vmatpush2.msra.mxu0 0.0
        %520 = vmatprep.subr.mxu0 0.0
        %521 = vmatpush2.msra.mxu0 0.0
        %522 = vmatprep.subr.mxu0 0.0
        %523 = vmatpush2.msra.mxu0 0.0
        %524 = vmatprep.subr.mxu0 0.0
        %525 = vmatpush2.msra.mxu0 0.0
        %526 = vmatprep.mubr.f32.mxu0 0.0
        %527 = vmatmul.mubr.f32.gmra.mxu0 %v436
        %v528 = vpop.f32.mrf.mxu0
        %v529 = vadd.f32 %v397, %v528
        %v530 = vpop.f32.mrf.mxu0
        %531 = vmatprep.mubr.f32.mxu0 0.0
        %532 = vmatmul.mubr.f32.gmra.mxu0 %v439
        %v533 = vpop.f32.mrf.mxu0
        %v534 = vadd.f32 %v402, %v533
        %v535 = vpop.f32.mrf.mxu0
        %536 = vmatprep.mubr.f32.mxu0 0.0
        %537 = vmatmul.mubr.f32.gmra.mxu0 %v442
        %v538 = vpop.f32.mrf.mxu0
        %v539 = vadd.f32 %v407, %v538
        %v540 = vpop.f32.mrf.mxu0
        %541 = vmatprep.mubr.f32.mxu0 0.0
        %542 = vmatmul.mubr.f32.gmra.mxu0 %v445
        %v543 = vpop.f32.mrf.mxu0
        %v544 = vadd.f32 %v412, %v543
        %v545 = vpop.f32.mrf.mxu0
        %546 = vmatprep.mubr.f32.mxu0 0.0
        %547 = vmatmul.mubr.f32.gmra.mxu0 %v448
        %v548 = vpop.f32.mrf.mxu0
        %v549 = vadd.f32 %v417, %v548
        %v550 = vpop.f32.mrf.mxu0
        %551 = vmatprep.mubr.f32.mxu0 0.0
        %552 = vmatmul.mubr.f32.gmra.mxu0 %v451
        %v553 = vpop.f32.mrf.mxu0
        %v554 = vadd.f32 %v422, %v553
        %v555 = vpop.f32.mrf.mxu0
        %556 = vmatprep.mubr.f32.mxu0 0.0
        %557 = vmatmul.mubr.f32.gmra.mxu0 %v454
        %v558 = vpop.f32.mrf.mxu0
        %v559 = vadd.f32 %v427, %v558
        %v560 = vpop.f32.mrf.mxu0
        %561 = vmatprep.mubr.f32.mxu0 0.0
        %562 = vmatmul.mubr.f32.gmra.mxu0 %v457
        %v563 = vpop.f32.mrf.mxu0
        %v564 = vadd.f32 %v432, %v563
        %v565 = vpop.f32.mrf.mxu0
        %566 = vdwg.mxu0
        %v567 = vld [vmem:[%s200] sm:$0xf]
        %v568 = vld [vmem:[%s200 + $0x4] sm:$0x1]
        %v569 = vld [vmem:[%s200 + $0x1c] sm:$0xf]
        %v570 = vld [vmem:[%s200 + $0x20] sm:$0x1]
        %v571 = vld [vmem:[%s200 + $0x38] sm:$0xf]
        %v572 = vld [vmem:[%s200 + $0x3c] sm:$0x1]
        %v573 = vld [vmem:[%s200 + $0x54] sm:$0xf]
        %v574 = vld [vmem:[%s200 + $0x58] sm:$0x1]
        %v575 = vld [vmem:[%s200 + $0x70] sm:$0xf]
        %v576 = vld [vmem:[%s200 + $0x74] sm:$0x1]
        %v577 = vld [vmem:[%s200 + $0x8c] sm:$0xf]
        %v578 = vld [vmem:[%s200 + $0x90] sm:$0x1]
        %v579 = vld [vmem:[%s200 + $0xa8] sm:$0xf]
        %v580 = vld [vmem:[%s200 + $0xac] sm:$0x1]
        %v581 = vld [vmem:[%s200 + $0xc4] sm:$0xf]
        %v582 = vld [vmem:[%s200 + $0xc8] sm:$0x1]
        %v583 = vunpack.c.l.bf16 %v567
        %v584 = vunpack.c.l.bf16 %v568
        %v585 = vunpack.c.l.bf16 %v569
        %v586 = vunpack.c.l.bf16 %v570
        %v587 = vunpack.c.l.bf16 %v571
        %v588 = vunpack.c.l.bf16 %v572
        %v589 = vunpack.c.l.bf16 %v573
        %v590 = vunpack.c.l.bf16 %v574
        %v591 = vunpack.c.l.bf16 %v575
        %v592 = vunpack.c.l.bf16 %v576
        %v593 = vunpack.c.l.bf16 %v577
        %v594 = vunpack.c.l.bf16 %v578
        %v595 = vunpack.c.l.bf16 %v579
        %v596 = vunpack.c.l.bf16 %v580
        %v597 = vunpack.c.l.bf16 %v581
        %v598 = vunpack.c.l.bf16 %v582
        %v615 = vrot.slane %v583, 1
        %v616 = vrot.slane %v584, 1
        %v617 = vsel %vm284, %v615, %v616
        %v618 = vrot.slane %v585, 1
        %v619 = vrot.slane %v586, 1
        %v620 = vsel %vm284, %v618, %v619
        %v621 = vrot.slane %v587, 1
        %v622 = vrot.slane %v588, 1
        %v623 = vsel %vm284, %v621, %v622
        %v624 = vrot.slane %v589, 1
        %v625 = vrot.slane %v590, 1
        %v626 = vsel %vm284, %v624, %v625
        %v627 = vrot.slane %v591, 1
        %v628 = vrot.slane %v592, 1
        %v629 = vsel %vm284, %v627, %v628
        %v630 = vrot.slane %v593, 1
        %v631 = vrot.slane %v594, 1
        %v632 = vsel %vm284, %v630, %v631
        %v633 = vrot.slane %v595, 1
        %v634 = vrot.slane %v596, 1
        %v635 = vsel %vm284, %v633, %v634
        %v636 = vrot.slane %v597, 1
        %v637 = vrot.slane %v598, 1
        %v638 = vsel %vm284, %v636, %v637
        %v639 = vsel %vm309, %v617, 0
        %v641 = vsel %vm309, %v620, 0
        %v643 = vsel %vm309, %v623, 0
        %v645 = vsel %vm309, %v626, 0
        %v647 = vsel %vm309, %v629, 0
        %v649 = vsel %vm309, %v632, 0
        %v651 = vsel %vm309, %v635, 0
        %v653 = vsel %vm309, %v638, 0
        %v656 = vsel %vm326, %v213, 0
        %658 = vmatprep.subr.mxu0 0.0
        %659 = vmatpush1.msra.mxu0 0.0
        %660 = vmatprep.subr.mxu0 0.0
        %661 = vmatpush1.msra.mxu0 0.0
        %662 = vmatprep.subr.mxu0 0.0
        %663 = vmatpush1.msra.mxu0 0.0
        %664 = vmatprep.subr.mxu0 0.0
        %665 = vmatpush1.msra.mxu0 0.0
        %666 = vmatprep.subr.mxu0 0.0
        %667 = vmatpush1.msra.mxu0 0.0
        %668 = vmatprep.subr.mxu0 0.0
        %669 = vmatpush1.msra.mxu0 0.0
        %670 = vmatprep.subr.mxu0 0.0
        %671 = vmatpush1.msra.mxu0 0.0
        %672 = vmatprep.subr.mxu0 0.0
        %673 = vmatpush1.msra.mxu0 0.0
        %674 = vmatprep.subr.mxu0 0.0
        %675 = vmatpush1.msra.mxu0 0.0
        %676 = vmatprep.subr.mxu0 0.0
        %677 = vmatpush1.msra.mxu0 0.0
        %678 = vmatprep.subr.mxu0 0.0
        %679 = vmatpush1.msra.mxu0 0.0
        %680 = vmatprep.subr.mxu0 0.0
        %681 = vmatpush1.msra.mxu0 0.0
        %682 = vmatprep.subr.mxu0 0.0
        %683 = vmatpush1.msra.mxu0 0.0
        %684 = vmatprep.subr.mxu0 0.0
        %685 = vmatpush1.msra.mxu0 0.0
        %686 = vmatprep.subr.mxu0 0.0
        %687 = vmatpush1.msra.mxu0 0.0
        %688 = vmatprep.subr.mxu0 0.0
        %689 = vmatpush1.msra.mxu0 %v656
        %690 = vmatprep.subr.mxu0 0.0
        %691 = vmatpush2.msra.mxu0 0.0
        %692 = vmatprep.subr.mxu0 0.0
        %693 = vmatpush2.msra.mxu0 0.0
        %694 = vmatprep.subr.mxu0 0.0
        %695 = vmatpush2.msra.mxu0 0.0
        %696 = vmatprep.subr.mxu0 0.0
        %697 = vmatpush2.msra.mxu0 0.0
        %698 = vmatprep.subr.mxu0 0.0
        %699 = vmatpush2.msra.mxu0 0.0
        %700 = vmatprep.subr.mxu0 0.0
        %701 = vmatpush2.msra.mxu0 0.0
        %702 = vmatprep.subr.mxu0 0.0
        %703 = vmatpush2.msra.mxu0 0.0
        %704 = vmatprep.subr.mxu0 0.0
        %705 = vmatpush2.msra.mxu0 0.0
        %706 = vmatprep.subr.mxu0 0.0
        %707 = vmatpush2.msra.mxu0 0.0
        %708 = vmatprep.subr.mxu0 0.0
        %709 = vmatpush2.msra.mxu0 0.0
        %710 = vmatprep.subr.mxu0 0.0
        %711 = vmatpush2.msra.mxu0 0.0
        %712 = vmatprep.subr.mxu0 0.0
        %713 = vmatpush2.msra.mxu0 0.0
        %714 = vmatprep.subr.mxu0 0.0
        %715 = vmatpush2.msra.mxu0 0.0
        %716 = vmatprep.subr.mxu0 0.0
        %717 = vmatpush2.msra.mxu0 0.0
        %718 = vmatprep.subr.mxu0 0.0
        %719 = vmatpush2.msra.mxu0 0.0
        %720 = vmatprep.subr.mxu0 0.0
        %721 = vmatpush2.msra.mxu0 0.0
        %722 = vmatprep.mubr.f32.mxu0 0.0
        %723 = vmatmul.mubr.f32.gmra.mxu0 %v639
        %v724 = vpop.f32.mrf.mxu0
        %v725 = vadd.f32 0.0, %v724
        %v726 = vpop.f32.mrf.mxu0
        %727 = vmatprep.mubr.f32.mxu0 0.0
        %728 = vmatmul.mubr.f32.gmra.mxu0 %v641
        %v729 = vpop.f32.mrf.mxu0
        %v730 = vadd.f32 0.0, %v729
        %v731 = vpop.f32.mrf.mxu0
        %732 = vmatprep.mubr.f32.mxu0 0.0
        %733 = vmatmul.mubr.f32.gmra.mxu0 %v643
        %v734 = vpop.f32.mrf.mxu0
        %v735 = vadd.f32 0.0, %v734
        %v736 = vpop.f32.mrf.mxu0
        %737 = vmatprep.mubr.f32.mxu0 0.0
        %738 = vmatmul.mubr.f32.gmra.mxu0 %v645
        %v739 = vpop.f32.mrf.mxu0
        %v740 = vadd.f32 0.0, %v739
        %v741 = vpop.f32.mrf.mxu0
        %742 = vmatprep.mubr.f32.mxu0 0.0
        %743 = vmatmul.mubr.f32.gmra.mxu0 %v647
        %v744 = vpop.f32.mrf.mxu0
        %v745 = vadd.f32 0.0, %v744
        %v746 = vpop.f32.mrf.mxu0
        %747 = vmatprep.mubr.f32.mxu0 0.0
        %748 = vmatmul.mubr.f32.gmra.mxu0 %v649
        %v749 = vpop.f32.mrf.mxu0
        %v750 = vadd.f32 0.0, %v749
        %v751 = vpop.f32.mrf.mxu0
        %752 = vmatprep.mubr.f32.mxu0 0.0
        %753 = vmatmul.mubr.f32.gmra.mxu0 %v651
        %v754 = vpop.f32.mrf.mxu0
        %v755 = vadd.f32 0.0, %v754
        %v756 = vpop.f32.mrf.mxu0
        %757 = vmatprep.mubr.f32.mxu0 0.0
        %758 = vmatmul.mubr.f32.gmra.mxu0 %v653
        %v759 = vpop.f32.mrf.mxu0
        %v760 = vadd.f32 0.0, %v759
        %v761 = vpop.f32.mrf.mxu0
        %762 = vdwg.mxu0
        %v763 = vadd.f32 %v529, %v725
        %v764 = vadd.f32 %v534, %v730
        %v765 = vadd.f32 %v539, %v735
        %v766 = vadd.f32 %v544, %v740
        %v767 = vadd.f32 %v549, %v745
        %v768 = vadd.f32 %v554, %v750
        %v769 = vadd.f32 %v559, %v755
        %v770 = vadd.f32 %v564, %v760
        %v771 = vld [vmem:[%s200 + $0x8] sm:$0xe]
        %v772 = vld [vmem:[%s200 + $0xc] sm:$0x1]
        %v773 = vld [vmem:[%s200 + $0x24] sm:$0xe]
        %v774 = vld [vmem:[%s200 + $0x28] sm:$0x1]
        %v775 = vld [vmem:[%s200 + $0x40] sm:$0xe]
        %v776 = vld [vmem:[%s200 + $0x44] sm:$0x1]
        %v777 = vld [vmem:[%s200 + $0x5c] sm:$0xe]
        %v778 = vld [vmem:[%s200 + $0x60] sm:$0x1]
        %v779 = vld [vmem:[%s200 + $0x78] sm:$0xe]
        %v780 = vld [vmem:[%s200 + $0x7c] sm:$0x1]
        %v781 = vld [vmem:[%s200 + $0x94] sm:$0xe]
        %v782 = vld [vmem:[%s200 + $0x98] sm:$0x1]
        %v783 = vld [vmem:[%s200 + $0xb0] sm:$0xe]
        %v784 = vld [vmem:[%s200 + $0xb4] sm:$0x1]
        %v785 = vld [vmem:[%s200 + $0xcc] sm:$0xe]
        %v786 = vld [vmem:[%s200 + $0xd0] sm:$0x1]
        %v787 = vunpack.c.l.bf16 %v771
        %v788 = vunpack.c.l.bf16 %v772
        %v789 = vunpack.c.l.bf16 %v773
        %v790 = vunpack.c.l.bf16 %v774
        %v791 = vunpack.c.l.bf16 %v775
        %v792 = vunpack.c.l.bf16 %v776
        %v793 = vunpack.c.l.bf16 %v777
        %v794 = vunpack.c.l.bf16 %v778
        %v795 = vunpack.c.l.bf16 %v779
        %v796 = vunpack.c.l.bf16 %v780
        %v797 = vunpack.c.l.bf16 %v781
        %v798 = vunpack.c.l.bf16 %v782
        %v799 = vunpack.c.l.bf16 %v783
        %v800 = vunpack.c.l.bf16 %v784
        %v801 = vunpack.c.l.bf16 %v785
        %v802 = vunpack.c.l.bf16 %v786
        %vm819 = vcmask 1045504
        %v820 = vrot.slane %v787, 2
        %v821 = vrot.slane %v788, 2
        %v822 = vsel %vm819, %v820, %v821
        %v823 = vrot.slane %v789, 2
        %v824 = vrot.slane %v790, 2
        %v825 = vsel %vm819, %v823, %v824
        %v826 = vrot.slane %v791, 2
        %v827 = vrot.slane %v792, 2
        %v828 = vsel %vm819, %v826, %v827
        %v829 = vrot.slane %v793, 2
        %v830 = vrot.slane %v794, 2
        %v831 = vsel %vm819, %v829, %v830
        %v832 = vrot.slane %v795, 2
        %v833 = vrot.slane %v796, 2
        %v834 = vsel %vm819, %v832, %v833
        %v835 = vrot.slane %v797, 2
        %v836 = vrot.slane %v798, 2
        %v837 = vsel %vm819, %v835, %v836
        %v838 = vrot.slane %v799, 2
        %v839 = vrot.slane %v800, 2
        %v840 = vsel %vm819, %v838, %v839
        %v841 = vrot.slane %v801, 2
        %v842 = vrot.slane %v802, 2
        %v843 = vsel %vm819, %v841, %v842
        %v844 = vsel %vm309, %v822, 0
        %v846 = vsel %vm309, %v825, 0
        %v848 = vsel %vm309, %v828, 0
        %v850 = vsel %vm309, %v831, 0
        %v852 = vsel %vm309, %v834, 0
        %v854 = vsel %vm309, %v837, 0
        %v856 = vsel %vm309, %v840, 0
        %v858 = vsel %vm309, %v843, 0
        %v861 = vsel %vm326, %v214, 0
        %863 = vmatprep.subr.mxu0 0.0
        %864 = vmatpush1.msra.mxu0 0.0
        %865 = vmatprep.subr.mxu0 0.0
        %866 = vmatpush1.msra.mxu0 0.0
        %867 = vmatprep.subr.mxu0 0.0
        %868 = vmatpush1.msra.mxu0 0.0
        %869 = vmatprep.subr.mxu0 0.0
        %870 = vmatpush1.msra.mxu0 0.0
        %871 = vmatprep.subr.mxu0 0.0
        %872 = vmatpush1.msra.mxu0 0.0
        %873 = vmatprep.subr.mxu0 0.0
        %874 = vmatpush1.msra.mxu0 0.0
        %875 = vmatprep.subr.mxu0 0.0
        %876 = vmatpush1.msra.mxu0 0.0
        %877 = vmatprep.subr.mxu0 0.0
        %878 = vmatpush1.msra.mxu0 0.0
        %879 = vmatprep.subr.mxu0 0.0
        %880 = vmatpush1.msra.mxu0 0.0
        %881 = vmatprep.subr.mxu0 0.0
        %882 = vmatpush1.msra.mxu0 0.0
        %883 = vmatprep.subr.mxu0 0.0
        %884 = vmatpush1.msra.mxu0 0.0
        %885 = vmatprep.subr.mxu0 0.0
        %886 = vmatpush1.msra.mxu0 0.0
        %887 = vmatprep.subr.mxu0 0.0
        %888 = vmatpush1.msra.mxu0 0.0
        %889 = vmatprep.subr.mxu0 0.0
        %890 = vmatpush1.msra.mxu0 0.0
        %891 = vmatprep.subr.mxu0 0.0
        %892 = vmatpush1.msra.mxu0 0.0
        %893 = vmatprep.subr.mxu0 0.0
        %894 = vmatpush1.msra.mxu0 %v861
        %895 = vmatprep.subr.mxu0 0.0
        %896 = vmatpush2.msra.mxu0 0.0
        %897 = vmatprep.subr.mxu0 0.0
        %898 = vmatpush2.msra.mxu0 0.0
        %899 = vmatprep.subr.mxu0 0.0
        %900 = vmatpush2.msra.mxu0 0.0
        %901 = vmatprep.subr.mxu0 0.0
        %902 = vmatpush2.msra.mxu0 0.0
        %903 = vmatprep.subr.mxu0 0.0
        %904 = vmatpush2.msra.mxu0 0.0
        %905 = vmatprep.subr.mxu0 0.0
        %906 = vmatpush2.msra.mxu0 0.0
        %907 = vmatprep.subr.mxu0 0.0
        %908 = vmatpush2.msra.mxu0 0.0
        %909 = vmatprep.subr.mxu0 0.0
        %910 = vmatpush2.msra.mxu0 0.0
        %911 = vmatprep.subr.mxu0 0.0
        %912 = vmatpush2.msra.mxu0 0.0
        %913 = vmatprep.subr.mxu0 0.0
        %914 = vmatpush2.msra.mxu0 0.0
        %915 = vmatprep.subr.mxu0 0.0
        %916 = vmatpush2.msra.mxu0 0.0
        %917 = vmatprep.subr.mxu0 0.0
        %918 = vmatpush2.msra.mxu0 0.0
        %919 = vmatprep.subr.mxu0 0.0
        %920 = vmatpush2.msra.mxu0 0.0
        %921 = vmatprep.subr.mxu0 0.0
        %922 = vmatpush2.msra.mxu0 0.0
        %923 = vmatprep.subr.mxu0 0.0
        %924 = vmatpush2.msra.mxu0 0.0
        %925 = vmatprep.subr.mxu0 0.0
        %926 = vmatpush2.msra.mxu0 0.0
        %927 = vmatprep.mubr.f32.mxu0 0.0
        %928 = vmatmul.mubr.f32.gmra.mxu0 %v844
        %v929 = vpop.f32.mrf.mxu0
        %v930 = vadd.f32 0.0, %v929
        %v931 = vpop.f32.mrf.mxu0
        %932 = vmatprep.mubr.f32.mxu0 0.0
        %933 = vmatmul.mubr.f32.gmra.mxu0 %v846
        %v934 = vpop.f32.mrf.mxu0
        %v935 = vadd.f32 0.0, %v934
        %v936 = vpop.f32.mrf.mxu0
        %937 = vmatprep.mubr.f32.mxu0 0.0
        %938 = vmatmul.mubr.f32.gmra.mxu0 %v848
        %v939 = vpop.f32.mrf.mxu0
        %v940 = vadd.f32 0.0, %v939
        %v941 = vpop.f32.mrf.mxu0
        %942 = vmatprep.mubr.f32.mxu0 0.0
        %943 = vmatmul.mubr.f32.gmra.mxu0 %v850
        %v944 = vpop.f32.mrf.mxu0
        %v945 = vadd.f32 0.0, %v944
        %v946 = vpop.f32.mrf.mxu0
        %947 = vmatprep.mubr.f32.mxu0 0.0
        %948 = vmatmul.mubr.f32.gmra.mxu0 %v852
        %v949 = vpop.f32.mrf.mxu0
        %v950 = vadd.f32 0.0, %v949
        %v951 = vpop.f32.mrf.mxu0
        %952 = vmatprep.mubr.f32.mxu0 0.0
        %953 = vmatmul.mubr.f32.gmra.mxu0 %v854
        %v954 = vpop.f32.mrf.mxu0
        %v955 = vadd.f32 0.0, %v954
        %v956 = vpop.f32.mrf.mxu0
        %957 = vmatprep.mubr.f32.mxu0 0.0
        %958 = vmatmul.mubr.f32.gmra.mxu0 %v856
        %v959 = vpop.f32.mrf.mxu0
        %v960 = vadd.f32 0.0, %v959
        %v961 = vpop.f32.mrf.mxu0
        %962 = vmatprep.mubr.f32.mxu0 0.0
        %963 = vmatmul.mubr.f32.gmra.mxu0 %v858
        %v964 = vpop.f32.mrf.mxu0
        %v965 = vadd.f32 0.0, %v964
        %v966 = vpop.f32.mrf.mxu0
        %967 = vdwg.mxu0
        %v968 = vadd.f32 %v763, %v930
        %v969 = vadd.f32 %v764, %v935
        %v970 = vadd.f32 %v765, %v940
        %v971 = vadd.f32 %v766, %v945
        %v972 = vadd.f32 %v767, %v950
        %v973 = vadd.f32 %v768, %v955
        %v974 = vadd.f32 %v769, %v960
        %v975 = vadd.f32 %v770, %v965
        %v976 = vld [vmem:[%s200 + $0xc] sm:$0xe]
        %v977 = vld [vmem:[%s200 + $0x10] sm:$0x3]
        %v978 = vld [vmem:[%s200 + $0x28] sm:$0xe]
        %v979 = vld [vmem:[%s200 + $0x2c] sm:$0x3]
        %v980 = vld [vmem:[%s200 + $0x44] sm:$0xe]
        %v981 = vld [vmem:[%s200 + $0x48] sm:$0x3]
        %v982 = vld [vmem:[%s200 + $0x60] sm:$0xe]
        %v983 = vld [vmem:[%s200 + $0x64] sm:$0x3]
        %v984 = vld [vmem:[%s200 + $0x7c] sm:$0xe]
        %v985 = vld [vmem:[%s200 + $0x80] sm:$0x3]
        %v986 = vld [vmem:[%s200 + $0x98] sm:$0xe]
        %v987 = vld [vmem:[%s200 + $0x9c] sm:$0x3]
        %v988 = vld [vmem:[%s200 + $0xb4] sm:$0xe]
        %v989 = vld [vmem:[%s200 + $0xb8] sm:$0x3]
        %v990 = vld [vmem:[%s200 + $0xd0] sm:$0xe]
        %v991 = vld [vmem:[%s200 + $0xd4] sm:$0x3]
        %v992 = vunpack.c.l.bf16 %v976
        %v993 = vunpack.c.l.bf16 %v977
        %v994 = vunpack.c.l.bf16 %v978
        %v995 = vunpack.c.l.bf16 %v979
        %v996 = vunpack.c.l.bf16 %v980
        %v997 = vunpack.c.l.bf16 %v981
        %v998 = vunpack.c.l.bf16 %v982
        %v999 = vunpack.c.l.bf16 %v983
        %v1000 = vunpack.c.l.bf16 %v984
        %v1001 = vunpack.c.l.bf16 %v985
        %v1002 = vunpack.c.l.bf16 %v986
        %v1003 = vunpack.c.l.bf16 %v987
        %v1004 = vunpack.c.l.bf16 %v988
        %v1005 = vunpack.c.l.bf16 %v989
        %v1006 = vunpack.c.l.bf16 %v990
        %v1007 = vunpack.c.l.bf16 %v991
        %vm1024 = vcmask 1044480
        %v1025 = vrot.slane %v992, 3
        %v1026 = vrot.slane %v993, 3
        %v1027 = vsel %vm1024, %v1025, %v1026
        %v1028 = vrot.slane %v994, 3
        %v1029 = vrot.slane %v995, 3
        %v1030 = vsel %vm1024, %v1028, %v1029
        %v1031 = vrot.slane %v996, 3
        %v1032 = vrot.slane %v997, 3
        %v1033 = vsel %vm1024, %v1031, %v1032
        %v1034 = vrot.slane %v998, 3
        %v1035 = vrot.slane %v999, 3
        %v1036 = vsel %vm1024, %v1034, %v1035
        %v1037 = vrot.slane %v1000, 3
        %v1038 = vrot.slane %v1001, 3
        %v1039 = vsel %vm1024, %v1037, %v1038
        %v1040 = vrot.slane %v1002, 3
        %v1041 = vrot.slane %v1003, 3
        %v1042 = vsel %vm1024, %v1040, %v1041
        %v1043 = vrot.slane %v1004, 3
        %v1044 = vrot.slane %v1005, 3
        %v1045 = vsel %vm1024, %v1043, %v1044
        %v1046 = vrot.slane %v1006, 3
        %v1047 = vrot.slane %v1007, 3
        %v1048 = vsel %vm1024, %v1046, %v1047
        %v1049 = vsel %vm309, %v1027, 0
        %v1051 = vsel %vm309, %v1030, 0
        %v1053 = vsel %vm309, %v1033, 0
        %v1055 = vsel %vm309, %v1036, 0
        %v1057 = vsel %vm309, %v1039, 0
        %v1059 = vsel %vm309, %v1042, 0
        %v1061 = vsel %vm309, %v1045, 0
        %v1063 = vsel %vm309, %v1048, 0
        %v1066 = vsel %vm326, %v215, 0
        %1068 = vmatprep.subr.mxu0 0.0
        %1069 = vmatpush1.msra.mxu0 0.0
        %1070 = vmatprep.subr.mxu0 0.0
        %1071 = vmatpush1.msra.mxu0 0.0
        %1072 = vmatprep.subr.mxu0 0.0
        %1073 = vmatpush1.msra.mxu0 0.0
        %1074 = vmatprep.subr.mxu0 0.0
        %1075 = vmatpush1.msra.mxu0 0.0
        %1076 = vmatprep.subr.mxu0 0.0
        %1077 = vmatpush1.msra.mxu0 0.0
        %1078 = vmatprep.subr.mxu0 0.0
        %1079 = vmatpush1.msra.mxu0 0.0
        %1080 = vmatprep.subr.mxu0 0.0
        %1081 = vmatpush1.msra.mxu0 0.0
        %1082 = vmatprep.subr.mxu0 0.0
        %1083 = vmatpush1.msra.mxu0 0.0
        %1084 = vmatprep.subr.mxu0 0.0
        %1085 = vmatpush1.msra.mxu0 0.0
        %1086 = vmatprep.subr.mxu0 0.0
        %1087 = vmatpush1.msra.mxu0 0.0
        %1088 = vmatprep.subr.mxu0 0.0
        %1089 = vmatpush1.msra.mxu0 0.0
        %1090 = vmatprep.subr.mxu0 0.0
        %1091 = vmatpush1.msra.mxu0 0.0
        %1092 = vmatprep.subr.mxu0 0.0
        %1093 = vmatpush1.msra.mxu0 0.0
        %1094 = vmatprep.subr.mxu0 0.0
        %1095 = vmatpush1.msra.mxu0 0.0
        %1096 = vmatprep.subr.mxu0 0.0
        %1097 = vmatpush1.msra.mxu0 0.0
        %1098 = vmatprep.subr.mxu0 0.0
        %1099 = vmatpush1.msra.mxu0 %v1066
        %1100 = vmatprep.subr.mxu0 0.0
        %1101 = vmatpush2.msra.mxu0 0.0
        %1102 = vmatprep.subr.mxu0 0.0
        %1103 = vmatpush2.msra.mxu0 0.0
        %1104 = vmatprep.subr.mxu0 0.0
        %1105 = vmatpush2.msra.mxu0 0.0
        %1106 = vmatprep.subr.mxu0 0.0
        %1107 = vmatpush2.msra.mxu0 0.0
        %1108 = vmatprep.subr.mxu0 0.0
        %1109 = vmatpush2.msra.mxu0 0.0
        %1110 = vmatprep.subr.mxu0 0.0
        %1111 = vmatpush2.msra.mxu0 0.0
        %1112 = vmatprep.subr.mxu0 0.0
        %1113 = vmatpush2.msra.mxu0 0.0
        %1114 = vmatprep.subr.mxu0 0.0
        %1115 = vmatpush2.msra.mxu0 0.0
        %1116 = vmatprep.subr.mxu0 0.0
        %1117 = vmatpush2.msra.mxu0 0.0
        %1118 = vmatprep.subr.mxu0 0.0
        %1119 = vmatpush2.msra.mxu0 0.0
        %1120 = vmatprep.subr.mxu0 0.0
        %1121 = vmatpush2.msra.mxu0 0.0
        %1122 = vmatprep.subr.mxu0 0.0
        %1123 = vmatpush2.msra.mxu0 0.0
        %1124 = vmatprep.subr.mxu0 0.0
        %1125 = vmatpush2.msra.mxu0 0.0
        %1126 = vmatprep.subr.mxu0 0.0
        %1127 = vmatpush2.msra.mxu0 0.0
        %1128 = vmatprep.subr.mxu0 0.0
        %1129 = vmatpush2.msra.mxu0 0.0
        %1130 = vmatprep.subr.mxu0 0.0
        %1131 = vmatpush2.msra.mxu0 0.0
        %1132 = vmatprep.mubr.f32.mxu0 0.0
        %1133 = vmatmul.mubr.f32.gmra.mxu0 %v1049
        %v1134 = vpop.f32.mrf.mxu0
        %v1135 = vadd.f32 0.0, %v1134
        %v1136 = vpop.f32.mrf.mxu0
        %1137 = vmatprep.mubr.f32.mxu0 0.0
        %1138 = vmatmul.mubr.f32.gmra.mxu0 %v1051
        %v1139 = vpop.f32.mrf.mxu0
        %v1140 = vadd.f32 0.0, %v1139
        %v1141 = vpop.f32.mrf.mxu0
        %1142 = vmatprep.mubr.f32.mxu0 0.0
        %1143 = vmatmul.mubr.f32.gmra.mxu0 %v1053
        %v1144 = vpop.f32.mrf.mxu0
        %v1145 = vadd.f32 0.0, %v1144
        %v1146 = vpop.f32.mrf.mxu0
        %1147 = vmatprep.mubr.f32.mxu0 0.0
        %1148 = vmatmul.mubr.f32.gmra.mxu0 %v1055
        %v1149 = vpop.f32.mrf.mxu0
        %v1150 = vadd.f32 0.0, %v1149
        %v1151 = vpop.f32.mrf.mxu0
        %1152 = vmatprep.mubr.f32.mxu0 0.0
        %1153 = vmatmul.mubr.f32.gmra.mxu0 %v1057
        %v1154 = vpop.f32.mrf.mxu0
        %v1155 = vadd.f32 0.0, %v1154
        %v1156 = vpop.f32.mrf.mxu0
        %1157 = vmatprep.mubr.f32.mxu0 0.0
        %1158 = vmatmul.mubr.f32.gmra.mxu0 %v1059
        %v1159 = vpop.f32.mrf.mxu0
        %v1160 = vadd.f32 0.0, %v1159
        %v1161 = vpop.f32.mrf.mxu0
        %1162 = vmatprep.mubr.f32.mxu0 0.0
        %1163 = vmatmul.mubr.f32.gmra.mxu0 %v1061
        %v1164 = vpop.f32.mrf.mxu0
        %v1165 = vadd.f32 0.0, %v1164
        %v1166 = vpop.f32.mrf.mxu0
        %1167 = vmatprep.mubr.f32.mxu0 0.0
        %1168 = vmatmul.mubr.f32.gmra.mxu0 %v1063
        %v1169 = vpop.f32.mrf.mxu0
        %v1170 = vadd.f32 0.0, %v1169
        %v1171 = vpop.f32.mrf.mxu0
        %1172 = vdwg.mxu0
        %v1173 = vadd.f32 %v968, %v1135
        %v1174 = vadd.f32 %v969, %v1140
        %v1175 = vadd.f32 %v970, %v1145
        %v1176 = vadd.f32 %v971, %v1150
        %v1177 = vadd.f32 %v972, %v1155
        %v1178 = vadd.f32 %v973, %v1160
        %v1179 = vadd.f32 %v974, %v1165
        %v1180 = vadd.f32 %v975, %v1170
        %v1181 = vld [vmem:[%s200 + $0xc] sm:$0x3]
        %v1182 = vld [vmem:[%s200 + $0x28] sm:$0x3]
        %v1183 = vld [vmem:[%s200 + $0x44] sm:$0x3]
        %v1184 = vld [vmem:[%s200 + $0x60] sm:$0x3]
        %v1185 = vld [vmem:[%s200 + $0x7c] sm:$0x3]
        %v1186 = vld [vmem:[%s200 + $0x98] sm:$0x3]
        %v1187 = vld [vmem:[%s200 + $0xb4] sm:$0x3]
        %v1188 = vld [vmem:[%s200 + $0xd0] sm:$0x3]
        %v1189 = vunpack.c.l.bf16 %v1181
        %v1190 = vunpack.c.l.bf16 %v1182
        %v1191 = vunpack.c.l.bf16 %v1183
        %v1192 = vunpack.c.l.bf16 %v1184
        %v1193 = vunpack.c.l.bf16 %v1185
        %v1194 = vunpack.c.l.bf16 %v1186
        %v1195 = vunpack.c.l.bf16 %v1187
        %v1196 = vunpack.c.l.bf16 %v1188
        %v1205 = vrot.slane %v787, 3
        %v1206 = vrot.slane %v1189, 3
        %v1207 = vsel %vm1024, %v1205, %v1206
        %v1208 = vrot.slane %v789, 3
        %v1209 = vrot.slane %v1190, 3
        %v1210 = vsel %vm1024, %v1208, %v1209
        %v1211 = vrot.slane %v791, 3
        %v1212 = vrot.slane %v1191, 3
        %v1213 = vsel %vm1024, %v1211, %v1212
        %v1214 = vrot.slane %v793, 3
        %v1215 = vrot.slane %v1192, 3
        %v1216 = vsel %vm1024, %v1214, %v1215
        %v1217 = vrot.slane %v795, 3
        %v1218 = vrot.slane %v1193, 3
        %v1219 = vsel %vm1024, %v1217, %v1218
        %v1220 = vrot.slane %v797, 3
        %v1221 = vrot.slane %v1194, 3
        %v1222 = vsel %vm1024, %v1220, %v1221
        %v1223 = vrot.slane %v799, 3
        %v1224 = vrot.slane %v1195, 3
        %v1225 = vsel %vm1024, %v1223, %v1224
        %v1226 = vrot.slane %v801, 3
        %v1227 = vrot.slane %v1196, 3
        %v1228 = vsel %vm1024, %v1226, %v1227
        %v1229 = vsel %vm309, %v1207, 0
        %v1231 = vsel %vm309, %v1210, 0
        %v1233 = vsel %vm309, %v1213, 0
        %v1235 = vsel %vm309, %v1216, 0
        %v1237 = vsel %vm309, %v1219, 0
        %v1239 = vsel %vm309, %v1222, 0
        %v1241 = vsel %vm309, %v1225, 0
        %v1243 = vsel %vm309, %v1228, 0
        %v1246 = vsel %vm326, %v216, 0
        %1248 = vmatprep.subr.mxu0 0.0
        %1249 = vmatpush1.msra.mxu0 0.0
        %1250 = vmatprep.subr.mxu0 0.0
        %1251 = vmatpush1.msra.mxu0 0.0
        %1252 = vmatprep.subr.mxu0 0.0
        %1253 = vmatpush1.msra.mxu0 0.0
        %1254 = vmatprep.subr.mxu0 0.0
        %1255 = vmatpush1.msra.mxu0 0.0
        %1256 = vmatprep.subr.mxu0 0.0
        %1257 = vmatpush1.msra.mxu0 0.0
        %1258 = vmatprep.subr.mxu0 0.0
        %1259 = vmatpush1.msra.mxu0 0.0
        %1260 = vmatprep.subr.mxu0 0.0
        %1261 = vmatpush1.msra.mxu0 0.0
        %1262 = vmatprep.subr.mxu0 0.0
        %1263 = vmatpush1.msra.mxu0 0.0
        %1264 = vmatprep.subr.mxu0 0.0
        %1265 = vmatpush1.msra.mxu0 0.0
        %1266 = vmatprep.subr.mxu0 0.0
        %1267 = vmatpush1.msra.mxu0 0.0
        %1268 = vmatprep.subr.mxu0 0.0
        %1269 = vmatpush1.msra.mxu0 0.0
        %1270 = vmatprep.subr.mxu0 0.0
        %1271 = vmatpush1.msra.mxu0 0.0
        %1272 = vmatprep.subr.mxu0 0.0
        %1273 = vmatpush1.msra.mxu0 0.0
        %1274 = vmatprep.subr.mxu0 0.0
        %1275 = vmatpush1.msra.mxu0 0.0
        %1276 = vmatprep.subr.mxu0 0.0
        %1277 = vmatpush1.msra.mxu0 0.0
        %1278 = vmatprep.subr.mxu0 0.0
        %1279 = vmatpush1.msra.mxu0 %v1246
        %1280 = vmatprep.subr.mxu0 0.0
        %1281 = vmatpush2.msra.mxu0 0.0
        %1282 = vmatprep.subr.mxu0 0.0
        %1283 = vmatpush2.msra.mxu0 0.0
        %1284 = vmatprep.subr.mxu0 0.0
        %1285 = vmatpush2.msra.mxu0 0.0
        %1286 = vmatprep.subr.mxu0 0.0
        %1287 = vmatpush2.msra.mxu0 0.0
        %1288 = vmatprep.subr.mxu0 0.0
        %1289 = vmatpush2.msra.mxu0 0.0
        %1290 = vmatprep.subr.mxu0 0.0
        %1291 = vmatpush2.msra.mxu0 0.0
        %1292 = vmatprep.subr.mxu0 0.0
        %1293 = vmatpush2.msra.mxu0 0.0
        %1294 = vmatprep.subr.mxu0 0.0
        %1295 = vmatpush2.msra.mxu0 0.0
        %1296 = vmatprep.subr.mxu0 0.0
        %1297 = vmatpush2.msra.mxu0 0.0
        %1298 = vmatprep.subr.mxu0 0.0
        %1299 = vmatpush2.msra.mxu0 0.0
        %1300 = vmatprep.subr.mxu0 0.0
        %1301 = vmatpush2.msra.mxu0 0.0
        %1302 = vmatprep.subr.mxu0 0.0
        %1303 = vmatpush2.msra.mxu0 0.0
        %1304 = vmatprep.subr.mxu0 0.0
        %1305 = vmatpush2.msra.mxu0 0.0
        %1306 = vmatprep.subr.mxu0 0.0
        %1307 = vmatpush2.msra.mxu0 0.0
        %1308 = vmatprep.subr.mxu0 0.0
        %1309 = vmatpush2.msra.mxu0 0.0
        %1310 = vmatprep.subr.mxu0 0.0
        %1311 = vmatpush2.msra.mxu0 0.0
        %1312 = vmatprep.mubr.f32.mxu0 0.0
        %1313 = vmatmul.mubr.f32.gmra.mxu0 %v1229
        %v1314 = vpop.f32.mrf.mxu0
        %v1315 = vadd.f32 0.0, %v1314
        %v1316 = vpop.f32.mrf.mxu0
        %1317 = vmatprep.mubr.f32.mxu0 0.0
        %1318 = vmatmul.mubr.f32.gmra.mxu0 %v1231
        %v1319 = vpop.f32.mrf.mxu0
        %v1320 = vadd.f32 0.0, %v1319
        %v1321 = vpop.f32.mrf.mxu0
        %1322 = vmatprep.mubr.f32.mxu0 0.0
        %1323 = vmatmul.mubr.f32.gmra.mxu0 %v1233
        %v1324 = vpop.f32.mrf.mxu0
        %v1325 = vadd.f32 0.0, %v1324
        %v1326 = vpop.f32.mrf.mxu0
        %1327 = vmatprep.mubr.f32.mxu0 0.0
        %1328 = vmatmul.mubr.f32.gmra.mxu0 %v1235
        %v1329 = vpop.f32.mrf.mxu0
        %v1330 = vadd.f32 0.0, %v1329
        %v1331 = vpop.f32.mrf.mxu0
        %1332 = vmatprep.mubr.f32.mxu0 0.0
        %1333 = vmatmul.mubr.f32.gmra.mxu0 %v1237
        %v1334 = vpop.f32.mrf.mxu0
        %v1335 = vadd.f32 0.0, %v1334
        %v1336 = vpop.f32.mrf.mxu0
        %1337 = vmatprep.mubr.f32.mxu0 0.0
        %1338 = vmatmul.mubr.f32.gmra.mxu0 %v1239
        %v1339 = vpop.f32.mrf.mxu0
        %v1340 = vadd.f32 0.0, %v1339
        %v1341 = vpop.f32.mrf.mxu0
        %1342 = vmatprep.mubr.f32.mxu0 0.0
        %1343 = vmatmul.mubr.f32.gmra.mxu0 %v1241
        %v1344 = vpop.f32.mrf.mxu0
        %v1345 = vadd.f32 0.0, %v1344
        %v1346 = vpop.f32.mrf.mxu0
        %1347 = vmatprep.mubr.f32.mxu0 0.0
        %1348 = vmatmul.mubr.f32.gmra.mxu0 %v1243
        %v1349 = vpop.f32.mrf.mxu0
        %v1350 = vadd.f32 0.0, %v1349
        %v1351 = vpop.f32.mrf.mxu0
        %1352 = vdwg.mxu0
        %v1353 = vadd.f32 %v1173, %v1315
        %v1354 = vadd.f32 %v1174, %v1320
        %v1355 = vadd.f32 %v1175, %v1325
        %v1356 = vadd.f32 %v1176, %v1330
        %v1357 = vadd.f32 %v1177, %v1335
        %v1358 = vadd.f32 %v1178, %v1340
        %v1359 = vadd.f32 %v1179, %v1345
        %v1360 = vadd.f32 %v1180, %v1350
        %v1361 = vld [vmem:[%s200 + $0x10] sm:$0xc]
        %v1362 = vld [vmem:[%s200 + $0x14] sm:$0x3]
        %v1363 = vld [vmem:[%s200 + $0x2c] sm:$0xc]
        %v1364 = vld [vmem:[%s200 + $0x30] sm:$0x3]
        %v1365 = vld [vmem:[%s200 + $0x48] sm:$0xc]
        %v1366 = vld [vmem:[%s200 + $0x4c] sm:$0x3]
        %v1367 = vld [vmem:[%s200 + $0x64] sm:$0xc]
        %v1368 = vld [vmem:[%s200 + $0x68] sm:$0x3]
        %v1369 = vld [vmem:[%s200 + $0x80] sm:$0xc]
        %v1370 = vld [vmem:[%s200 + $0x84] sm:$0x3]
        %v1371 = vld [vmem:[%s200 + $0x9c] sm:$0xc]
        %v1372 = vld [vmem:[%s200 + $0xa0] sm:$0x3]
        %v1373 = vld [vmem:[%s200 + $0xb8] sm:$0xc]
        %v1374 = vld [vmem:[%s200 + $0xbc] sm:$0x3]
        %v1375 = vld [vmem:[%s200 + $0xd4] sm:$0xc]
        %v1376 = vld [vmem:[%s200 + $0xd8] sm:$0x3]
        %v1377 = vunpack.c.l.bf16 %v1361
        %v1378 = vunpack.c.l.bf16 %v1362
        %v1379 = vunpack.c.l.bf16 %v1363
        %v1380 = vunpack.c.l.bf16 %v1364
        %v1381 = vunpack.c.l.bf16 %v1365
        %v1382 = vunpack.c.l.bf16 %v1366
        %v1383 = vunpack.c.l.bf16 %v1367
        %v1384 = vunpack.c.l.bf16 %v1368
        %v1385 = vunpack.c.l.bf16 %v1369
        %v1386 = vunpack.c.l.bf16 %v1370
        %v1387 = vunpack.c.l.bf16 %v1371
        %v1388 = vunpack.c.l.bf16 %v1372
        %v1389 = vunpack.c.l.bf16 %v1373
        %v1390 = vunpack.c.l.bf16 %v1374
        %v1391 = vunpack.c.l.bf16 %v1375
        %v1392 = vunpack.c.l.bf16 %v1376
        %v1409 = vrot.slane %v1377, 4
        %v1410 = vrot.slane %v1378, 4
        %v1411 = vsel %vm326, %v1409, %v1410
        %v1412 = vrot.slane %v1379, 4
        %v1413 = vrot.slane %v1380, 4
        %v1414 = vsel %vm326, %v1412, %v1413
        %v1415 = vrot.slane %v1381, 4
        %v1416 = vrot.slane %v1382, 4
        %v1417 = vsel %vm326, %v1415, %v1416
        %v1418 = vrot.slane %v1383, 4
        %v1419 = vrot.slane %v1384, 4
        %v1420 = vsel %vm326, %v1418, %v1419
        %v1421 = vrot.slane %v1385, 4
        %v1422 = vrot.slane %v1386, 4
        %v1423 = vsel %vm326, %v1421, %v1422
        %v1424 = vrot.slane %v1387, 4
        %v1425 = vrot.slane %v1388, 4
        %v1426 = vsel %vm326, %v1424, %v1425
        %v1427 = vrot.slane %v1389, 4
        %v1428 = vrot.slane %v1390, 4
        %v1429 = vsel %vm326, %v1427, %v1428
        %v1430 = vrot.slane %v1391, 4
        %v1431 = vrot.slane %v1392, 4
        %v1432 = vsel %vm326, %v1430, %v1431
        %v1433 = vsel %vm309, %v1411, 0
        %v1435 = vsel %vm309, %v1414, 0
        %v1437 = vsel %vm309, %v1417, 0
        %v1439 = vsel %vm309, %v1420, 0
        %v1441 = vsel %vm309, %v1423, 0
        %v1443 = vsel %vm309, %v1426, 0
        %v1445 = vsel %vm309, %v1429, 0
        %v1447 = vsel %vm309, %v1432, 0
        %v1450 = vsel %vm326, %v217, 0
        %1452 = vmatprep.subr.mxu0 0.0
        %1453 = vmatpush1.msra.mxu0 0.0
        %1454 = vmatprep.subr.mxu0 0.0
        %1455 = vmatpush1.msra.mxu0 0.0
        %1456 = vmatprep.subr.mxu0 0.0
        %1457 = vmatpush1.msra.mxu0 0.0
        %1458 = vmatprep.subr.mxu0 0.0
        %1459 = vmatpush1.msra.mxu0 0.0
        %1460 = vmatprep.subr.mxu0 0.0
        %1461 = vmatpush1.msra.mxu0 0.0
        %1462 = vmatprep.subr.mxu0 0.0
        %1463 = vmatpush1.msra.mxu0 0.0
        %1464 = vmatprep.subr.mxu0 0.0
        %1465 = vmatpush1.msra.mxu0 0.0
        %1466 = vmatprep.subr.mxu0 0.0
        %1467 = vmatpush1.msra.mxu0 0.0
        %1468 = vmatprep.subr.mxu0 0.0
        %1469 = vmatpush1.msra.mxu0 0.0
        %1470 = vmatprep.subr.mxu0 0.0
        %1471 = vmatpush1.msra.mxu0 0.0
        %1472 = vmatprep.subr.mxu0 0.0
        %1473 = vmatpush1.msra.mxu0 0.0
        %1474 = vmatprep.subr.mxu0 0.0
        %1475 = vmatpush1.msra.mxu0 0.0
        %1476 = vmatprep.subr.mxu0 0.0
        %1477 = vmatpush1.msra.mxu0 0.0
        %1478 = vmatprep.subr.mxu0 0.0
        %1479 = vmatpush1.msra.mxu0 0.0
        %1480 = vmatprep.subr.mxu0 0.0
        %1481 = vmatpush1.msra.mxu0 0.0
        %1482 = vmatprep.subr.mxu0 0.0
        %1483 = vmatpush1.msra.mxu0 %v1450
        %1484 = vmatprep.subr.mxu0 0.0
        %1485 = vmatpush2.msra.mxu0 0.0
        %1486 = vmatprep.subr.mxu0 0.0
        %1487 = vmatpush2.msra.mxu0 0.0
        %1488 = vmatprep.subr.mxu0 0.0
        %1489 = vmatpush2.msra.mxu0 0.0
        %1490 = vmatprep.subr.mxu0 0.0
        %1491 = vmatpush2.msra.mxu0 0.0
        %1492 = vmatprep.subr.mxu0 0.0
        %1493 = vmatpush2.msra.mxu0 0.0
        %1494 = vmatprep.subr.mxu0 0.0
        %1495 = vmatpush2.msra.mxu0 0.0
        %1496 = vmatprep.subr.mxu0 0.0
        %1497 = vmatpush2.msra.mxu0 0.0
        %1498 = vmatprep.subr.mxu0 0.0
        %1499 = vmatpush2.msra.mxu0 0.0
        %1500 = vmatprep.subr.mxu0 0.0
        %1501 = vmatpush2.msra.mxu0 0.0
        %1502 = vmatprep.subr.mxu0 0.0
        %1503 = vmatpush2.msra.mxu0 0.0
        %1504 = vmatprep.subr.mxu0 0.0
        %1505 = vmatpush2.msra.mxu0 0.0
        %1506 = vmatprep.subr.mxu0 0.0
        %1507 = vmatpush2.msra.mxu0 0.0
        %1508 = vmatprep.subr.mxu0 0.0
        %1509 = vmatpush2.msra.mxu0 0.0
        %1510 = vmatprep.subr.mxu0 0.0
        %1511 = vmatpush2.msra.mxu0 0.0
        %1512 = vmatprep.subr.mxu0 0.0
        %1513 = vmatpush2.msra.mxu0 0.0
        %1514 = vmatprep.subr.mxu0 0.0
        %1515 = vmatpush2.msra.mxu0 0.0
        %1516 = vmatprep.mubr.f32.mxu0 0.0
        %1517 = vmatmul.mubr.f32.gmra.mxu0 %v1433
        %v1518 = vpop.f32.mrf.mxu0
        %v1519 = vadd.f32 0.0, %v1518
        %v1520 = vpop.f32.mrf.mxu0
        %1521 = vmatprep.mubr.f32.mxu0 0.0
        %1522 = vmatmul.mubr.f32.gmra.mxu0 %v1435
        %v1523 = vpop.f32.mrf.mxu0
        %v1524 = vadd.f32 0.0, %v1523
        %v1525 = vpop.f32.mrf.mxu0
        %1526 = vmatprep.mubr.f32.mxu0 0.0
        %1527 = vmatmul.mubr.f32.gmra.mxu0 %v1437
        %v1528 = vpop.f32.mrf.mxu0
        %v1529 = vadd.f32 0.0, %v1528
        %v1530 = vpop.f32.mrf.mxu0
        %1531 = vmatprep.mubr.f32.mxu0 0.0
        %1532 = vmatmul.mubr.f32.gmra.mxu0 %v1439
        %v1533 = vpop.f32.mrf.mxu0
        %v1534 = vadd.f32 0.0, %v1533
        %v1535 = vpop.f32.mrf.mxu0
        %1536 = vmatprep.mubr.f32.mxu0 0.0
        %1537 = vmatmul.mubr.f32.gmra.mxu0 %v1441
        %v1538 = vpop.f32.mrf.mxu0
        %v1539 = vadd.f32 0.0, %v1538
        %v1540 = vpop.f32.mrf.mxu0
        %1541 = vmatprep.mubr.f32.mxu0 0.0
        %1542 = vmatmul.mubr.f32.gmra.mxu0 %v1443
        %v1543 = vpop.f32.mrf.mxu0
        %v1544 = vadd.f32 0.0, %v1543
        %v1545 = vpop.f32.mrf.mxu0
        %1546 = vmatprep.mubr.f32.mxu0 0.0
        %1547 = vmatmul.mubr.f32.gmra.mxu0 %v1445
        %v1548 = vpop.f32.mrf.mxu0
        %v1549 = vadd.f32 0.0, %v1548
        %v1550 = vpop.f32.mrf.mxu0
        %1551 = vmatprep.mubr.f32.mxu0 0.0
        %1552 = vmatmul.mubr.f32.gmra.mxu0 %v1447
        %v1553 = vpop.f32.mrf.mxu0
        %v1554 = vadd.f32 0.0, %v1553
        %v1555 = vpop.f32.mrf.mxu0
        %1556 = vdwg.mxu0
        %v1557 = vadd.f32 %v1353, %v1519
        %v1558 = vadd.f32 %v1354, %v1524
        %v1559 = vadd.f32 %v1355, %v1529
        %v1560 = vadd.f32 %v1356, %v1534
        %v1561 = vadd.f32 %v1357, %v1539
        %v1562 = vadd.f32 %v1358, %v1544
        %v1563 = vadd.f32 %v1359, %v1549
        %v1564 = vadd.f32 %v1360, %v1554
        %v1565 = vld [vmem:[%s200 + $0x14] sm:$0xc]
        %v1566 = vld [vmem:[%s200 + $0x18] sm:$0x7]
        %v1567 = vld [vmem:[%s200 + $0x30] sm:$0xc]
        %v1568 = vld [vmem:[%s200 + $0x34] sm:$0x7]
        %v1569 = vld [vmem:[%s200 + $0x4c] sm:$0xc]
        %v1570 = vld [vmem:[%s200 + $0x50] sm:$0x7]
        %v1571 = vld [vmem:[%s200 + $0x68] sm:$0xc]
        %v1572 = vld [vmem:[%s200 + $0x6c] sm:$0x7]
        %v1573 = vld [vmem:[%s200 + $0x84] sm:$0xc]
        %v1574 = vld [vmem:[%s200 + $0x88] sm:$0x7]
        %v1575 = vld [vmem:[%s200 + $0xa0] sm:$0xc]
        %v1576 = vld [vmem:[%s200 + $0xa4] sm:$0x7]
        %v1577 = vld [vmem:[%s200 + $0xbc] sm:$0xc]
        %v1578 = vld [vmem:[%s200 + $0xc0] sm:$0x7]
        %v1579 = vld [vmem:[%s200 + $0xd8] sm:$0xc]
        %v1580 = vld [vmem:[%s200 + $0xdc] sm:$0x7]
        %v1581 = vunpack.c.l.bf16 %v1565
        %v1582 = vunpack.c.l.bf16 %v1566
        %v1583 = vunpack.c.l.bf16 %v1567
        %v1584 = vunpack.c.l.bf16 %v1568
        %v1585 = vunpack.c.l.bf16 %v1569
        %v1586 = vunpack.c.l.bf16 %v1570
        %v1587 = vunpack.c.l.bf16 %v1571
        %v1588 = vunpack.c.l.bf16 %v1572
        %v1589 = vunpack.c.l.bf16 %v1573
        %v1590 = vunpack.c.l.bf16 %v1574
        %v1591 = vunpack.c.l.bf16 %v1575
        %v1592 = vunpack.c.l.bf16 %v1576
        %v1593 = vunpack.c.l.bf16 %v1577
        %v1594 = vunpack.c.l.bf16 %v1578
        %v1595 = vunpack.c.l.bf16 %v1579
        %v1596 = vunpack.c.l.bf16 %v1580
        %vm1613 = vcmask 1042432
        %v1614 = vrot.slane %v1581, 5
        %v1615 = vrot.slane %v1582, 5
        %v1616 = vsel %vm1613, %v1614, %v1615
        %v1617 = vrot.slane %v1583, 5
        %v1618 = vrot.slane %v1584, 5
        %v1619 = vsel %vm1613, %v1617, %v1618
        %v1620 = vrot.slane %v1585, 5
        %v1621 = vrot.slane %v1586, 5
        %v1622 = vsel %vm1613, %v1620, %v1621
        %v1623 = vrot.slane %v1587, 5
        %v1624 = vrot.slane %v1588, 5
        %v1625 = vsel %vm1613, %v1623, %v1624
        %v1626 = vrot.slane %v1589, 5
        %v1627 = vrot.slane %v1590, 5
        %v1628 = vsel %vm1613, %v1626, %v1627
        %v1629 = vrot.slane %v1591, 5
        %v1630 = vrot.slane %v1592, 5
        %v1631 = vsel %vm1613, %v1629, %v1630
        %v1632 = vrot.slane %v1593, 5
        %v1633 = vrot.slane %v1594, 5
        %v1634 = vsel %vm1613, %v1632, %v1633
        %v1635 = vrot.slane %v1595, 5
        %v1636 = vrot.slane %v1596, 5
        %v1637 = vsel %vm1613, %v1635, %v1636
        %v1638 = vsel %vm309, %v1616, 0
        %v1640 = vsel %vm309, %v1619, 0
        %v1642 = vsel %vm309, %v1622, 0
        %v1644 = vsel %vm309, %v1625, 0
        %v1646 = vsel %vm309, %v1628, 0
        %v1648 = vsel %vm309, %v1631, 0
        %v1650 = vsel %vm309, %v1634, 0
        %v1652 = vsel %vm309, %v1637, 0
        %v1655 = vsel %vm326, %v218, 0
        %1657 = vmatprep.subr.mxu0 0.0
        %1658 = vmatpush1.msra.mxu0 0.0
        %1659 = vmatprep.subr.mxu0 0.0
        %1660 = vmatpush1.msra.mxu0 0.0
        %1661 = vmatprep.subr.mxu0 0.0
        %1662 = vmatpush1.msra.mxu0 0.0
        %1663 = vmatprep.subr.mxu0 0.0
        %1664 = vmatpush1.msra.mxu0 0.0
        %1665 = vmatprep.subr.mxu0 0.0
        %1666 = vmatpush1.msra.mxu0 0.0
        %1667 = vmatprep.subr.mxu0 0.0
        %1668 = vmatpush1.msra.mxu0 0.0
        %1669 = vmatprep.subr.mxu0 0.0
        %1670 = vmatpush1.msra.mxu0 0.0
        %1671 = vmatprep.subr.mxu0 0.0
        %1672 = vmatpush1.msra.mxu0 0.0
        %1673 = vmatprep.subr.mxu0 0.0
        %1674 = vmatpush1.msra.mxu0 0.0
        %1675 = vmatprep.subr.mxu0 0.0
        %1676 = vmatpush1.msra.mxu0 0.0
        %1677 = vmatprep.subr.mxu0 0.0
        %1678 = vmatpush1.msra.mxu0 0.0
        %1679 = vmatprep.subr.mxu0 0.0
        %1680 = vmatpush1.msra.mxu0 0.0
        %1681 = vmatprep.subr.mxu0 0.0
        %1682 = vmatpush1.msra.mxu0 0.0
        %1683 = vmatprep.subr.mxu0 0.0
        %1684 = vmatpush1.msra.mxu0 0.0
        %1685 = vmatprep.subr.mxu0 0.0
        %1686 = vmatpush1.msra.mxu0 0.0
        %1687 = vmatprep.subr.mxu0 0.0
        %1688 = vmatpush1.msra.mxu0 %v1655
        %1689 = vmatprep.subr.mxu0 0.0
        %1690 = vmatpush2.msra.mxu0 0.0
        %1691 = vmatprep.subr.mxu0 0.0
        %1692 = vmatpush2.msra.mxu0 0.0
        %1693 = vmatprep.subr.mxu0 0.0
        %1694 = vmatpush2.msra.mxu0 0.0
        %1695 = vmatprep.subr.mxu0 0.0
        %1696 = vmatpush2.msra.mxu0 0.0
        %1697 = vmatprep.subr.mxu0 0.0
        %1698 = vmatpush2.msra.mxu0 0.0
        %1699 = vmatprep.subr.mxu0 0.0
        %1700 = vmatpush2.msra.mxu0 0.0
        %1701 = vmatprep.subr.mxu0 0.0
        %1702 = vmatpush2.msra.mxu0 0.0
        %1703 = vmatprep.subr.mxu0 0.0
        %1704 = vmatpush2.msra.mxu0 0.0
        %1705 = vmatprep.subr.mxu0 0.0
        %1706 = vmatpush2.msra.mxu0 0.0
        %1707 = vmatprep.subr.mxu0 0.0
        %1708 = vmatpush2.msra.mxu0 0.0
        %1709 = vmatprep.subr.mxu0 0.0
        %1710 = vmatpush2.msra.mxu0 0.0
        %1711 = vmatprep.subr.mxu0 0.0
        %1712 = vmatpush2.msra.mxu0 0.0
        %1713 = vmatprep.subr.mxu0 0.0
        %1714 = vmatpush2.msra.mxu0 0.0
        %1715 = vmatprep.subr.mxu0 0.0
        %1716 = vmatpush2.msra.mxu0 0.0
        %1717 = vmatprep.subr.mxu0 0.0
        %1718 = vmatpush2.msra.mxu0 0.0
        %1719 = vmatprep.subr.mxu0 0.0
        %1720 = vmatpush2.msra.mxu0 0.0
        %1721 = vmatprep.mubr.f32.mxu0 0.0
        %1722 = vmatmul.mubr.f32.gmra.mxu0 %v1638
        %v1723 = vpop.f32.mrf.mxu0
        %v1724 = vadd.f32 0.0, %v1723
        %v1725 = vpop.f32.mrf.mxu0
        %1726 = vmatprep.mubr.f32.mxu0 0.0
        %1727 = vmatmul.mubr.f32.gmra.mxu0 %v1640
        %v1728 = vpop.f32.mrf.mxu0
        %v1729 = vadd.f32 0.0, %v1728
        %v1730 = vpop.f32.mrf.mxu0
        %1731 = vmatprep.mubr.f32.mxu0 0.0
        %1732 = vmatmul.mubr.f32.gmra.mxu0 %v1642
        %v1733 = vpop.f32.mrf.mxu0
        %v1734 = vadd.f32 0.0, %v1733
        %v1735 = vpop.f32.mrf.mxu0
        %1736 = vmatprep.mubr.f32.mxu0 0.0
        %1737 = vmatmul.mubr.f32.gmra.mxu0 %v1644
        %v1738 = vpop.f32.mrf.mxu0
        %v1739 = vadd.f32 0.0, %v1738
        %v1740 = vpop.f32.mrf.mxu0
        %1741 = vmatprep.mubr.f32.mxu0 0.0
        %1742 = vmatmul.mubr.f32.gmra.mxu0 %v1646
        %v1743 = vpop.f32.mrf.mxu0
        %v1744 = vadd.f32 0.0, %v1743
        %v1745 = vpop.f32.mrf.mxu0
        %1746 = vmatprep.mubr.f32.mxu0 0.0
        %1747 = vmatmul.mubr.f32.gmra.mxu0 %v1648
        %v1748 = vpop.f32.mrf.mxu0
        %v1749 = vadd.f32 0.0, %v1748
        %v1750 = vpop.f32.mrf.mxu0
        %1751 = vmatprep.mubr.f32.mxu0 0.0
        %1752 = vmatmul.mubr.f32.gmra.mxu0 %v1650
        %v1753 = vpop.f32.mrf.mxu0
        %v1754 = vadd.f32 0.0, %v1753
        %v1755 = vpop.f32.mrf.mxu0
        %1756 = vmatprep.mubr.f32.mxu0 0.0
        %1757 = vmatmul.mubr.f32.gmra.mxu0 %v1652
        %v1758 = vpop.f32.mrf.mxu0
        %v1759 = vadd.f32 0.0, %v1758
        %v1760 = vpop.f32.mrf.mxu0
        %1761 = vdwg.mxu0
        %v1762 = vadd.f32 %v1557, %v1724
        %v1763 = vadd.f32 %v1558, %v1729
        %v1764 = vadd.f32 %v1559, %v1734
        %v1765 = vadd.f32 %v1560, %v1739
        %v1766 = vadd.f32 %v1561, %v1744
        %v1767 = vadd.f32 %v1562, %v1749
        %v1768 = vadd.f32 %v1563, %v1754
        %v1769 = vadd.f32 %v1564, %v1759
        %v1770 = vld [vmem:[%s200 + $0x14] sm:$0x7]
        %v1771 = vld [vmem:[%s200 + $0x30] sm:$0x7]
        %v1772 = vld [vmem:[%s200 + $0x4c] sm:$0x7]
        %v1773 = vld [vmem:[%s200 + $0x68] sm:$0x7]
        %v1774 = vld [vmem:[%s200 + $0x84] sm:$0x7]
        %v1775 = vld [vmem:[%s200 + $0xa0] sm:$0x7]
        %v1776 = vld [vmem:[%s200 + $0xbc] sm:$0x7]
        %v1777 = vld [vmem:[%s200 + $0xd8] sm:$0x7]
        %v1778 = vunpack.c.l.bf16 %v1770
        %v1779 = vunpack.c.l.bf16 %v1771
        %v1780 = vunpack.c.l.bf16 %v1772
        %v1781 = vunpack.c.l.bf16 %v1773
        %v1782 = vunpack.c.l.bf16 %v1774
        %v1783 = vunpack.c.l.bf16 %v1775
        %v1784 = vunpack.c.l.bf16 %v1776
        %v1785 = vunpack.c.l.bf16 %v1777
        %v1794 = vrot.slane %v1377, 5
        %v1795 = vrot.slane %v1778, 5
        %v1796 = vsel %vm1613, %v1794, %v1795
        %v1797 = vrot.slane %v1379, 5
        %v1798 = vrot.slane %v1779, 5
        %v1799 = vsel %vm1613, %v1797, %v1798
        %v1800 = vrot.slane %v1381, 5
        %v1801 = vrot.slane %v1780, 5
        %v1802 = vsel %vm1613, %v1800, %v1801
        %v1803 = vrot.slane %v1383, 5
        %v1804 = vrot.slane %v1781, 5
        %v1805 = vsel %vm1613, %v1803, %v1804
        %v1806 = vrot.slane %v1385, 5
        %v1807 = vrot.slane %v1782, 5
        %v1808 = vsel %vm1613, %v1806, %v1807
        %v1809 = vrot.slane %v1387, 5
        %v1810 = vrot.slane %v1783, 5
        %v1811 = vsel %vm1613, %v1809, %v1810
        %v1812 = vrot.slane %v1389, 5
        %v1813 = vrot.slane %v1784, 5
        %v1814 = vsel %vm1613, %v1812, %v1813
        %v1815 = vrot.slane %v1391, 5
        %v1816 = vrot.slane %v1785, 5
        %v1817 = vsel %vm1613, %v1815, %v1816
        %v1818 = vsel %vm309, %v1796, 0
        %v1820 = vsel %vm309, %v1799, 0
        %v1822 = vsel %vm309, %v1802, 0
        %v1824 = vsel %vm309, %v1805, 0
        %v1826 = vsel %vm309, %v1808, 0
        %v1828 = vsel %vm309, %v1811, 0
        %v1830 = vsel %vm309, %v1814, 0
        %v1832 = vsel %vm309, %v1817, 0
        %v1835 = vsel %vm326, %v219, 0
        %1837 = vmatprep.subr.mxu0 0.0
        %1838 = vmatpush1.msra.mxu0 0.0
        %1839 = vmatprep.subr.mxu0 0.0
        %1840 = vmatpush1.msra.mxu0 0.0
        %1841 = vmatprep.subr.mxu0 0.0
        %1842 = vmatpush1.msra.mxu0 0.0
        %1843 = vmatprep.subr.mxu0 0.0
        %1844 = vmatpush1.msra.mxu0 0.0
        %1845 = vmatprep.subr.mxu0 0.0
        %1846 = vmatpush1.msra.mxu0 0.0
        %1847 = vmatprep.subr.mxu0 0.0
        %1848 = vmatpush1.msra.mxu0 0.0
        %1849 = vmatprep.subr.mxu0 0.0
        %1850 = vmatpush1.msra.mxu0 0.0
        %1851 = vmatprep.subr.mxu0 0.0
        %1852 = vmatpush1.msra.mxu0 0.0
        %1853 = vmatprep.subr.mxu0 0.0
        %1854 = vmatpush1.msra.mxu0 0.0
        %1855 = vmatprep.subr.mxu0 0.0
        %1856 = vmatpush1.msra.mxu0 0.0
        %1857 = vmatprep.subr.mxu0 0.0
        %1858 = vmatpush1.msra.mxu0 0.0
        %1859 = vmatprep.subr.mxu0 0.0
        %1860 = vmatpush1.msra.mxu0 0.0
        %1861 = vmatprep.subr.mxu0 0.0
        %1862 = vmatpush1.msra.mxu0 0.0
        %1863 = vmatprep.subr.mxu0 0.0
        %1864 = vmatpush1.msra.mxu0 0.0
        %1865 = vmatprep.subr.mxu0 0.0
        %1866 = vmatpush1.msra.mxu0 0.0
        %1867 = vmatprep.subr.mxu0 0.0
        %1868 = vmatpush1.msra.mxu0 %v1835
        %1869 = vmatprep.subr.mxu0 0.0
        %1870 = vmatpush2.msra.mxu0 0.0
        %1871 = vmatprep.subr.mxu0 0.0
        %1872 = vmatpush2.msra.mxu0 0.0
        %1873 = vmatprep.subr.mxu0 0.0
        %1874 = vmatpush2.msra.mxu0 0.0
        %1875 = vmatprep.subr.mxu0 0.0
        %1876 = vmatpush2.msra.mxu0 0.0
        %1877 = vmatprep.subr.mxu0 0.0
        %1878 = vmatpush2.msra.mxu0 0.0
        %1879 = vmatprep.subr.mxu0 0.0
        %1880 = vmatpush2.msra.mxu0 0.0
        %1881 = vmatprep.subr.mxu0 0.0
        %1882 = vmatpush2.msra.mxu0 0.0
        %1883 = vmatprep.subr.mxu0 0.0
        %1884 = vmatpush2.msra.mxu0 0.0
        %1885 = vmatprep.subr.mxu0 0.0
        %1886 = vmatpush2.msra.mxu0 0.0
        %1887 = vmatprep.subr.mxu0 0.0
        %1888 = vmatpush2.msra.mxu0 0.0
        %1889 = vmatprep.subr.mxu0 0.0
        %1890 = vmatpush2.msra.mxu0 0.0
        %1891 = vmatprep.subr.mxu0 0.0
        %1892 = vmatpush2.msra.mxu0 0.0
        %1893 = vmatprep.subr.mxu0 0.0
        %1894 = vmatpush2.msra.mxu0 0.0
        %1895 = vmatprep.subr.mxu0 0.0
        %1896 = vmatpush2.msra.mxu0 0.0
        %1897 = vmatprep.subr.mxu0 0.0
        %1898 = vmatpush2.msra.mxu0 0.0
        %1899 = vmatprep.subr.mxu0 0.0
        %1900 = vmatpush2.msra.mxu0 0.0
        %1901 = vmatprep.mubr.f32.mxu0 0.0
        %1902 = vmatmul.mubr.f32.gmra.mxu0 %v1818
        %v1903 = vpop.f32.mrf.mxu0
        %v1904 = vadd.f32 0.0, %v1903
        %v1905 = vpop.f32.mrf.mxu0
        %1906 = vmatprep.mubr.f32.mxu0 0.0
        %1907 = vmatmul.mubr.f32.gmra.mxu0 %v1820
        %v1908 = vpop.f32.mrf.mxu0
        %v1909 = vadd.f32 0.0, %v1908
        %v1910 = vpop.f32.mrf.mxu0
        %1911 = vmatprep.mubr.f32.mxu0 0.0
        %1912 = vmatmul.mubr.f32.gmra.mxu0 %v1822
        %v1913 = vpop.f32.mrf.mxu0
        %v1914 = vadd.f32 0.0, %v1913
        %v1915 = vpop.f32.mrf.mxu0
        %1916 = vmatprep.mubr.f32.mxu0 0.0
        %1917 = vmatmul.mubr.f32.gmra.mxu0 %v1824
        %v1918 = vpop.f32.mrf.mxu0
        %v1919 = vadd.f32 0.0, %v1918
        %v1920 = vpop.f32.mrf.mxu0
        %1921 = vmatprep.mubr.f32.mxu0 0.0
        %1922 = vmatmul.mubr.f32.gmra.mxu0 %v1826
        %v1923 = vpop.f32.mrf.mxu0
        %v1924 = vadd.f32 0.0, %v1923
        %v1925 = vpop.f32.mrf.mxu0
        %1926 = vmatprep.mubr.f32.mxu0 0.0
        %1927 = vmatmul.mubr.f32.gmra.mxu0 %v1828
        %v1928 = vpop.f32.mrf.mxu0
        %v1929 = vadd.f32 0.0, %v1928
        %v1930 = vpop.f32.mrf.mxu0
        %1931 = vmatprep.mubr.f32.mxu0 0.0
        %1932 = vmatmul.mubr.f32.gmra.mxu0 %v1830
        %v1933 = vpop.f32.mrf.mxu0
        %v1934 = vadd.f32 0.0, %v1933
        %v1935 = vpop.f32.mrf.mxu0
        %1936 = vmatprep.mubr.f32.mxu0 0.0
        %1937 = vmatmul.mubr.f32.gmra.mxu0 %v1832
        %v1938 = vpop.f32.mrf.mxu0
        %v1939 = vadd.f32 0.0, %v1938
        %v1940 = vpop.f32.mrf.mxu0
        %1941 = vdwg.mxu0
        %v1942 = vadd.f32 %v1762, %v1904
        %v1943 = vadd.f32 %v1763, %v1909
        %v1944 = vadd.f32 %v1764, %v1914
        %v1945 = vadd.f32 %v1765, %v1919
        %v1946 = vadd.f32 %v1766, %v1924
        %v1947 = vadd.f32 %v1767, %v1929
        %v1948 = vadd.f32 %v1768, %v1934
        %v1949 = vadd.f32 %v1769, %v1939
        %v1950 = vld [vmem:[%s2] sm:$0x1]
        %v1952 = vlaneseq
        %v1953 = vshrl.u32 %v1952, 7
        %v1954 = vsub.s32 0, %v1953
        %v1955 = vrot.slane %v1950, %v1954
        %v1957 = vadd.f32 %v1942, %v1955
        %v1958 = vadd.f32 %v1943, %v1955
        %v1959 = vadd.f32 %v1944, %v1955
        %v1960 = vadd.f32 %v1945, %v1955
        %v1961 = vadd.f32 %v1946, %v1955
        %v1962 = vadd.f32 %v1947, %v1955
        %v1963 = vadd.f32 %v1948, %v1955
        %v1964 = vadd.f32 %v1949, %v1955
        %v1965 = vmax.f32 %v1957, 0.0
        %v1966 = vmax.f32 %v1958, 0.0
        %v1967 = vmax.f32 %v1959, 0.0
        %v1968 = vmax.f32 %v1960, 0.0
        %v1969 = vmax.f32 %v1961, 0.0
        %v1970 = vmax.f32 %v1962, 0.0
        %v1971 = vmax.f32 %v1963, 0.0
        %v1972 = vmax.f32 %v1964, 0.0
        %1973 = vxpose.xlu0.b32.start [1/16] %v1965, 128
        %1974 = vxpose.xlu0.b32.cont [2/16] %v1966, 128
        %1975 = vxpose.xlu0.b32.cont [3/16] %v1967, 128
        %1976 = vxpose.xlu0.b32.cont [4/16] %v1968, 128
        %1977 = vxpose.xlu0.b32.cont [5/16] %v1969, 128
        %1978 = vxpose.xlu0.b32.cont [6/16] %v1970, 128
        %1979 = vxpose.xlu0.b32.cont [7/16] %v1971, 128
        %1980 = vxpose.xlu0.b32.cont [8/16] %v1972, 128
        %1981 = vxpose.xlu0.b32.cont [9/16] 0.0, 128
        %1982 = vxpose.xlu0.b32.cont [10/16] 0.0, 128
        %1983 = vxpose.xlu0.b32.cont [11/16] 0.0, 128
        %1984 = vxpose.xlu0.b32.cont [12/16] 0.0, 128
        %1985 = vxpose.xlu0.b32.cont [13/16] 0.0, 128
        %1986 = vxpose.xlu0.b32.cont [14/16] 0.0, 128
        %1987 = vxpose.xlu0.b32.cont [15/16] 0.0, 128
        %1988 = vxpose.xlu0.b32.end [16/16] 0.0, 128
        %v1989 = vpop.trf.xlu0
        %v1990 = vpop.trf.xlu0
        %v1991 = vpop.trf.xlu0
        %v1992 = vpop.trf.xlu0
        %v1993 = vpop.trf.xlu0
        %v1994 = vpop.trf.xlu0
        %v1995 = vpop.trf.xlu0
        %v1996 = vpop.trf.xlu0
        %v1997 = vpop.trf.xlu0
        %v1998 = vpop.trf.xlu0
        %v1999 = vpop.trf.xlu0
        %v2000 = vpop.trf.xlu0
        %v2001 = vpop.trf.xlu0
        %v2002 = vpop.trf.xlu0
        %v2003 = vpop.trf.xlu0
        %v2004 = vpop.trf.xlu0
        %vm2005 = vcmask 523264
        %2006 = vst.msk [vmem:[%s190] sm:$0xff] %vm2005, %v1989
        %2007 = vst.msk [vmem:[%s190 + $0x8] sm:$0xff] %vm2005, %v1990
        %2008 = vst.msk [vmem:[%s190 + $0x10] sm:$0xff] %vm2005, %v1991
        %2009 = vst.msk [vmem:[%s190 + $0x18] sm:$0xff] %vm2005, %v1992
        %s2010 = sand.u32 %s109, 1
        %s2011 = scalar_lea.sflag [#allocation3], %s2010
        %s2012 = sand.u32 %s109, 1
        %s2013 = smul.addr %s2012, 32
        %s2014 = scalar_lea.vmem [#allocation2], %s2013
        // Predicated region
        $region33: #{tpu_custom_call.1} parent=31 // pred_check
          %p2015 = pneg %p119
        $region34: #{tpu_custom_call.1} parent=31 // pred_check_branch
          %2017 = sbr.rel (%p2015) target = $region36
        $region35: #{tpu_custom_call.1} parent=31 // pred_region
          %s2019 = ssub.s32 512, 512
          %2020 = vsyncadd %s2011, %s2019
          %s2021 = smul.addr %s21, 4
          %s2022 = sadd.s32 %s22, %s2021
          %s2023 = smul.addr %s2022, 128
          %s2024 = scalar_lea.hbm %s3, %s2023
          %s2025 = sshll.u32 %s2014, 4
          %s2026 = int_to_ptr.vmem [resolvable:$true] %s2025
          %2031 = dma.vmem_to_hbm [thread:$0]  %s2026, 512, %s2024, %s2011, 128, 128, 8
        $region36: #{tpu_custom_call.1} parent=31 // pred_fallthru
          _
      $region32: #{tpu_custom_call.1} parent=5 // pred_fallthru
        _
      %p2032 = scmp.le.s32.totalorder 2, %s12
      // Predicated region
      $region37: #{tpu_custom_call.1} parent=5 // pred_check
        %p2033 = pneg %p2032
      $region38: #{tpu_custom_call.1} parent=5 // pred_check_branch
        %2035 = sbr.rel (%p2033) target = $region40
      $region39: #{tpu_custom_call.1} parent=5 // pred_region
        %s2036 = ssub.s32 %s12, 2
        // Predicated region
        $region41: #{tpu_custom_call.1} parent=39 // pred_check
          %p2037 = pneg %p125
        $region42: #{tpu_custom_call.1} parent=39 // pred_check_branch
          %2039 = sbr.rel (%p2037) target = $region44
        $region43: #{tpu_custom_call.1} parent=39 // pred_region
          %s2040 = sand.u32 %s110, 1
          %s2041 = scalar_lea.sflag [#allocation3], %s2040
          %s2042 = sand.u32 %s110, 1
          %s2043 = smul.addr %s2042, 32
          %s2044 = scalar_lea.vmem [#allocation2], %s2043
          %2045 = dma.done %s2041, 512
        $region44: #{tpu_custom_call.1} parent=39 // pred_fallthru
          _
      $region40: #{tpu_custom_call.1} parent=5 // pred_fallthru
        _
    $region6: #{tpu_custom_call.1} parent=1 // loop_footer
      %s16 = sadd.s32 1, %s12
    $region7: #{tpu_custom_call.1} parent=1 // loop_footer_branch
      %11 = sbr.rel target = $region3
    $region8: #{tpu_custom_call.1} parent=1 // loop_exit
      _
    %2046 = vsyncpa [#allocation3], 1
    %s2047 = scalar_lea.sflag [#allocation3], 1
    %2048 = vsyncpa %s2047, 1

</llo_original>
